<compile_context>
chip_gen: v7x
topology: tpu7x:2x2x1
jax: 0.10.0
libtpu: 0.0.40
codegen_flags: <defaults>
</compile_context>

<pallas_src>
import jax
import jax.numpy as jnp
from jax.experimental import pallas as pl
from jax.experimental.pallas import tpu as pltpu

OFFSET_REG_DIM = 3
OUTLIER_DETECT_DIM = 1
OUT_DIM = OFFSET_REG_DIM + OUTLIER_DETECT_DIM


def _round_up(x, m):
    return ((x + m - 1) // m) * m


def _cdiv(a, b):
    return -(-a // b)


def _nbytes(a):
    return int(a.size) * a.dtype.itemsize


# ----------------------------------------------------------------------------
# Fused kernel: mask + stem + residual bottleneck blocks + head, one
# (batch, point-tile) grid cell per step.  Refs are (C, tile_p): channels on
# sublanes, points on the 128-lane axis, so every pointwise conv is
# W (Cout, Cin) @ X (Cin, tile_p) on the MXU and stores are lane-dense.
# ----------------------------------------------------------------------------
def _make_fused_kernel(depth):
    def kernel(x_ref, m_ref, stem_w, stem_b, blk_w1, blk_b1, blk_w2, blk_b2,
               head_w1, head_b1, head_w2, head_b2, o_ref):
        # Mask multiply fused in-kernel (VPU); then bf16 operands for the MXU.
        x = x_ref[...] * m_ref[...]                       # (Cin, tp) f32
        xb = x.astype(jnp.bfloat16)

        # Backbone stem conv + ReLU (bf16 dot, f32 accumulate / bias / relu).
        y = jnp.dot(stem_w[...], xb, preferred_element_type=jnp.float32)
        x32 = jnp.maximum(y + stem_b[...], 0.0)           # (width, tp) f32
        xb = x32.astype(jnp.bfloat16)

        # Residual bottleneck blocks; residual carried in f32.
        for d in range(depth):
            h = jnp.dot(blk_w1[d], xb, preferred_element_type=jnp.float32)
            h = jnp.maximum(h + blk_b1[d], 0.0).astype(jnp.bfloat16)
            y = jnp.dot(blk_w2[d], h, preferred_element_type=jnp.float32)
            y = y + blk_b2[d]
            x32 = jnp.maximum(y + x32, 0.0)
            xb = x32.astype(jnp.bfloat16)

        # Segmentation head: width -> width//2 -> OUT_DIM.
        h = jnp.dot(head_w1[...], xb, preferred_element_type=jnp.float32)
        h = jnp.maximum(h + head_b1[...], 0.0).astype(jnp.bfloat16)
        out = jnp.dot(head_w2[...], h, preferred_element_type=jnp.float32)
        out = out + head_b2[...]
        o_ref[...] = out.astype(o_ref.dtype)              # (4, tp) lane-dense

    return kernel


# ----------------------------------------------------------------------------
# Deterministic parameter init (kaiming_normal_ for conv weights, zero bias),
# matching OffsetRegOutlierDetectModel.init_weights().  Weights are stored as
# (Cout, Cin) f32 (reference precision); biases as (Cout, 1).
# ----------------------------------------------------------------------------
def _kaiming(key, cout, cin):
    std = (2.0 / cin) ** 0.5  # fan_in of a 1x1 Conv1d is Cin
    return std * jax.random.normal(key, (cout, cin), dtype=jnp.float32)


def build_params(key, input_features_dim, width, depth, bottleneck_ratio):
    if input_features_dim == 0:
        input_features_dim = 3
    bneck = width // bottleneck_ratio
    params = {}
    key, k = jax.random.split(key)
    params["stem_w"] = _kaiming(k, width, input_features_dim)
    params["stem_b"] = jnp.zeros((width, 1), jnp.float32)
    params["blocks"] = []
    for _ in range(depth):
        key, k1, k2 = jax.random.split(key, 3)
        params["blocks"].append(
            dict(
                w1=_kaiming(k1, bneck, width),
                b1=jnp.zeros((bneck, 1), jnp.float32),
                w2=_kaiming(k2, width, bneck),
                b2=jnp.zeros((width, 1), jnp.float32),
            )
        )
    key, k1, k2 = jax.random.split(key, 3)
    params["head_w1"] = _kaiming(k1, width // 2, width)
    params["head_b1"] = jnp.zeros((width // 2, 1), jnp.float32)
    params["head_w2"] = _kaiming(k2, OUT_DIM, width // 2)
    params["head_b2"] = jnp.zeros((OUT_DIM, 1), jnp.float32)
    return params


def _pack_kernel_params(params):
    """bf16 weights, stacked per-block arrays; biases stay f32."""
    depth = len(params["blocks"])
    width = params["stem_w"].shape[0]
    bneck = params["blocks"][0]["w1"].shape[0] if depth else max(width // 2, 8)

    def bf16(a):
        return a.astype(jnp.bfloat16)

    if depth:
        blk_w1 = jnp.stack([bf16(b["w1"]) for b in params["blocks"]])
        blk_b1 = jnp.stack([b["b1"] for b in params["blocks"]])
        blk_w2 = jnp.stack([bf16(b["w2"]) for b in params["blocks"]])
        blk_b2 = jnp.stack([b["b2"] for b in params["blocks"]])
    else:  # dummy (unused) arrays so the ref list has a fixed structure
        blk_w1 = jnp.zeros((1, bneck, width), jnp.bfloat16)
        blk_b1 = jnp.zeros((1, bneck, 1), jnp.float32)
        blk_w2 = jnp.zeros((1, width, bneck), jnp.bfloat16)
        blk_b2 = jnp.zeros((1, width, 1), jnp.float32)

    return (bf16(params["stem_w"]), params["stem_b"],
            blk_w1, blk_b1, blk_w2, blk_b2,
            bf16(params["head_w1"]), params["head_b1"],
            bf16(params["head_w2"]), params["head_b2"])


# ----------------------------------------------------------------------------
# Forward pass: forward(xyz, mask, features) -> (B, 4, N), native NCW layout.
# ----------------------------------------------------------------------------
def offset_reg_outlier_detect_forward(params, xyz, mask, features, *, tile_p=4096):
    B, N, _ = xyz.shape
    if features is None:
        feats = jnp.transpose(xyz, (0, 2, 1))          # (B, 3, N)
    else:
        feats = features                               # (B, Cin, N), PyTorch NCW
    feats = feats.astype(jnp.float32)
    Cin = feats.shape[1]

    # --- point-tile sizing -------------------------------------------------
    # Big tiles amortize per-step overhead; keep the total parallel grid >= 2
    # so both v7x TensorCores get work; derive the tile from N so padding
    # waste is < 128 points.
    tile_req = max(128, (min(int(tile_p), _round_up(N, 128)) // 128) * 128)
    n_tiles = _cdiv(N, tile_req)
    if B == 1 and N > 128:
        n_tiles = max(n_tiles, 2)
    tp = _round_up(_cdiv(N, n_tiles), 128)
    n_tiles = _cdiv(N, tp)
    N_pad = n_tiles * tp

    mask3 = mask.astype(jnp.float32).reshape(B, 1, N)
    if N_pad != N:
        feats = jnp.pad(feats, ((0, 0), (0, 0), (0, N_pad - N)))
        mask3 = jnp.pad(mask3, ((0, 0), (0, 0), (0, N_pad - N)))

    kp = _pack_kernel_params(params)
    depth = len(params["blocks"])
    width = params["stem_w"].shape[0]
    bneck = kp[2].shape[1]

    grid = (B, n_tiles)

    def tile_map(b, i):
        return (b, 0, i)

    in_specs = [
        pl.BlockSpec((pl.Squeezed(), Cin, tp), tile_map),   # features (B,Cin,N)
        pl.BlockSpec((pl.Squeezed(), 1, tp), tile_map),     # mask     (B,1,N)
    ]
    for a in kp:  # tiny weights/biases: whole-array resident, fetched once
        in_specs.append(pl.BlockSpec(a.shape, lambda b, i, _n=a.ndim: (0,) * _n))
    out_spec = pl.BlockSpec((pl.Squeezed(), OUT_DIM, tp), tile_map)

    # Advisory cost estimate: real FLOPs, weights counted once (invariant map).
    w_sizes = int(kp[0].size) + int(kp[2].size) + int(kp[4].size) \
        + int(kp[6].size) + int(kp[8].size)
    flops = 2 * B * N_pad * w_sizes
    bytes_accessed = (_nbytes(feats) + _nbytes(mask3)
                      + B * OUT_DIM * N_pad * 4
                      + sum(_nbytes(a) for a in kp))
    cost = pl.CostEstimate(flops=flops, transcendentals=0,
                           bytes_accessed=bytes_accessed)

    # Explicit VMEM budget (safe on v7x's 64 MiB as well as v5e/v6e):
    # double-buffered in/out tiles + resident (padded) weights + activations.
    wb_vmem = 4 * sum(_nbytes(a) for a in kp) + len(kp) * (8 * 128 * 4) * 2
    io_bytes = 2 * 4 * tp * (Cin + 1 + OUT_DIM)
    act_bytes = tp * (4 * Cin + 6 * width + 2 * max(bneck, width // 2, 8)
                      + 8 * OUT_DIM)
    vmem_limit = int(min(max(2 * (wb_vmem + io_bytes + act_bytes), 16 << 20),
                         48 << 20))

    out = pl.pallas_call(
        _make_fused_kernel(depth),
        out_shape=jax.ShapeDtypeStruct((B, OUT_DIM, N_pad), jnp.float32),
        grid_spec=pltpu.PrefetchScalarGridSpec(
            num_scalar_prefetch=0,
            grid=grid,
            in_specs=in_specs,
            out_specs=out_spec,
        ),
        compiler_params=pltpu.CompilerParams(
            dimension_semantics=("parallel", "parallel"),
            vmem_limit_bytes=vmem_limit,
        ),
        cost_estimate=cost,
    )(feats, mask3, *kp)

    return out[:, :, :N]                               # PyTorch NCW: (B, 4, N)


# ----------------------------------------------------------------------------
# Pure-JAX f32 reference (original module precision) for correctness check.
# ----------------------------------------------------------------------------
def forward_reference(params, xyz, mask, features):
    if features is None:
        feats = jnp.transpose(xyz, (0, 2, 1))
    else:
        feats = features
    x = feats * mask[:, None, :].astype(feats.dtype)   # (B, Cin, N)

    def conv(x, w, b, relu):
        y = jnp.einsum("oc,bcn->bon", w, x) + b[None, :, :]
        return jnp.maximum(y, 0.0) if relu else y

    x = conv(x, params["stem_w"], params["stem_b"], True)
    for blk in params["blocks"]:
        h = conv(x, blk["w1"], blk["b1"], True)
        y = jnp.einsum("oc,bcn->bon", blk["w2"], h) + blk["b2"][None, :, :]
        x = jnp.maximum(y + x, 0.0)
    h = conv(x, params["head_w1"], params["head_b1"], True)
    out = jnp.einsum("oc,bcn->bon", params["head_w2"], h) + params["head_b2"][None, :, :]
    return out


if __name__ == "__main__":
    # Small shapes consistent with forward(xyz, mask, features).
    B, N = 2, 1024                       # grid = (2, 1) -> 2 parallel cells
    input_features_dim = 3
    width, depth, bottleneck_ratio = 32, 2, 2

    key = jax.random.PRNGKey(0)
    kpar, kx, kf, km = jax.random.split(key, 4)

    params = build_params(kpar, input_features_dim, width, depth, bottleneck_ratio)

    xyz = jax.random.normal(kx, (B, N, 3), dtype=jnp.float32)
    features = jax.random.normal(kf, (B, input_features_dim, N), dtype=jnp.float32)
    mask = (jax.random.uniform(km, (B, N)) > 0.1).astype(jnp.float32)

    out = offset_reg_outlier_detect_forward(params, xyz, mask, features)
    out = jax.block_until_ready(out)

    assert out.shape == (B, OUT_DIM, N), out.shape
    assert bool(jnp.all(jnp.isfinite(out)))

    ref = jax.block_until_ready(forward_reference(params, xyz, mask, features))
    max_err = float(jnp.max(jnp.abs(out - ref)))
    scale = float(jnp.max(jnp.abs(ref))) + 1.0
    # bf16 matmul operands with f32 accumulation: comfortably inside 5e-2*scale.
    assert max_err <= 5e-2 * scale, (max_err, scale)

    print("KERNEL_OK")
</pallas_src>

<mosaic_0001>
module attributes {stable_mosaic.version = 11 : i64} {
  func.func @kernel(%arg0: i32, %arg1: i32, %arg2: memref<1x3x1024xf32, #tpu.memory_space<vmem>>, %arg3: memref<1x1x1024xf32, #tpu.memory_space<vmem>>, %arg4: memref<32x3xbf16, #tpu.memory_space<vmem>>, %arg5: memref<32x1xf32, #tpu.memory_space<vmem>>, %arg6: memref<2x16x32xbf16, #tpu.memory_space<vmem>>, %arg7: memref<2x16x1xf32, #tpu.memory_space<vmem>>, %arg8: memref<2x32x16xbf16, #tpu.memory_space<vmem>>, %arg9: memref<2x32x1xf32, #tpu.memory_space<vmem>>, %arg10: memref<16x32xbf16, #tpu.memory_space<vmem>>, %arg11: memref<16x1xf32, #tpu.memory_space<vmem>>, %arg12: memref<4x16xbf16, #tpu.memory_space<vmem>>, %arg13: memref<4x1xf32, #tpu.memory_space<vmem>>, %arg14: memref<1x4x1024xf32, #tpu.memory_space<vmem>>) attributes {dimension_semantics = [#tpu.dimension_semantics<parallel>, #tpu.dimension_semantics<parallel>], iteration_bounds = array<i64: 2, 1>, scalar_prefetch = 0 : i64, scratch_operands = 0 : i64, tpu.core_type = #tpu.core_type<tc>, window_params = [{transform_indices = @transform_0, window_bounds = array<i64: 1, 3, 1024>}, {transform_indices = @transform_1, window_bounds = array<i64: 1, 1, 1024>}, {pipeline_mode = #tpu.pipeline_mode<synchronous>, transform_indices = @transform_2, window_bounds = array<i64: 32, 3>}, {pipeline_mode = #tpu.pipeline_mode<synchronous>, transform_indices = @transform_3, window_bounds = array<i64: 32, 1>}, {pipeline_mode = #tpu.pipeline_mode<synchronous>, transform_indices = @transform_4, window_bounds = array<i64: 2, 16, 32>}, {pipeline_mode = #tpu.pipeline_mode<synchronous>, transform_indices = @transform_5, window_bounds = array<i64: 2, 16, 1>}, {pipeline_mode = #tpu.pipeline_mode<synchronous>, transform_indices = @transform_6, window_bounds = array<i64: 2, 32, 16>}, {pipeline_mode = #tpu.pipeline_mode<synchronous>, transform_indices = @transform_7, window_bounds = array<i64: 2, 32, 1>}, {pipeline_mode = #tpu.pipeline_mode<synchronous>, transform_indices = @transform_8, window_bounds = array<i64: 16, 32>}, {pipeline_mode = #tpu.pipeline_mode<synchronous>, transform_indices = @transform_9, window_bounds = array<i64: 16, 1>}, {pipeline_mode = #tpu.pipeline_mode<synchronous>, transform_indices = @transform_10, window_bounds = array<i64: 4, 16>}, {pipeline_mode = #tpu.pipeline_mode<synchronous>, transform_indices = @transform_11, window_bounds = array<i64: 4, 1>}, {transform_indices = @transform_12, window_bounds = array<i64: 1, 4, 1024>}]} {
    %c0 = arith.constant 0 : index
    %c0_0 = arith.constant 0 : index
    %c0_1 = arith.constant 0 : index
    %0 = vector.load %arg2[%c0, %c0_0, %c0_1] : memref<1x3x1024xf32, #tpu.memory_space<vmem>>, vector<1x3x1024xf32>
    %1 = vector.shape_cast %0 : vector<1x3x1024xf32> to vector<3x1024xf32>
    %c0_2 = arith.constant 0 : index
    %c0_3 = arith.constant 0 : index
    %c0_4 = arith.constant 0 : index
    %2 = vector.load %arg3[%c0_2, %c0_3, %c0_4] : memref<1x1x1024xf32, #tpu.memory_space<vmem>>, vector<1x1x1024xf32>
    %3 = vector.shape_cast %2 : vector<1x1x1024xf32> to vector<1x1024xf32>
    %4 = vector.broadcast %3 : vector<1x1024xf32> to vector<3x1024xf32>
    %5 = arith.mulf %1, %4 : vector<3x1024xf32>
    %6 = arith.truncf %5 : vector<3x1024xf32> to vector<3x1024xbf16>
    %c0_5 = arith.constant 0 : index
    %c0_6 = arith.constant 0 : index
    %7 = vector.load %arg4[%c0_5, %c0_6] : memref<32x3xbf16, #tpu.memory_space<vmem>>, vector<32x3xbf16>
    %cst = arith.constant dense<0.000000e+00> : vector<32x1024xf32>
    %8 = tpu.matmul %7, %6, %cst {dimension_numbers = #tpu.dot_dimension_numbers<[1], [0], [0], [1], [0, 0, 1, 1], [], []>} : vector<32x3xbf16>, vector<3x1024xbf16>, vector<32x1024xf32> -> vector<32x1024xf32>
    %c0_7 = arith.constant 0 : index
    %c0_8 = arith.constant 0 : index
    %9 = vector.load %arg5[%c0_7, %c0_8] : memref<32x1xf32, #tpu.memory_space<vmem>>, vector<32x1xf32>
    %10 = vector.broadcast %9 : vector<32x1xf32> to vector<32x1024xf32>
    %11 = arith.addf %8, %10 : vector<32x1024xf32>
    %cst_9 = arith.constant 0.000000e+00 : f32
    %12 = vector.broadcast %cst_9 : f32 to vector<32x1024xf32>
    %13 = arith.maximumf %11, %12 : vector<32x1024xf32>
    %14 = arith.truncf %13 : vector<32x1024xf32> to vector<32x1024xbf16>
    %c0_10 = arith.constant 0 : index
    %c0_11 = arith.constant 0 : index
    %c0_12 = arith.constant 0 : index
    %15 = vector.load %arg6[%c0_10, %c0_11, %c0_12] : memref<2x16x32xbf16, #tpu.memory_space<vmem>>, vector<1x16x32xbf16>
    %16 = vector.shape_cast %15 : vector<1x16x32xbf16> to vector<16x32xbf16>
    %cst_13 = arith.constant dense<0.000000e+00> : vector<16x1024xf32>
    %17 = tpu.matmul %16, %14, %cst_13 {dimension_numbers = #tpu.dot_dimension_numbers<[1], [0], [0], [1], [0, 0, 1, 1], [], []>} : vector<16x32xbf16>, vector<32x1024xbf16>, vector<16x1024xf32> -> vector<16x1024xf32>
    %c0_14 = arith.constant 0 : index
    %c0_15 = arith.constant 0 : index
    %c0_16 = arith.constant 0 : index
    %18 = vector.load %arg7[%c0_14, %c0_15, %c0_16] : memref<2x16x1xf32, #tpu.memory_space<vmem>>, vector<1x16x1xf32>
    %19 = vector.shape_cast %18 : vector<1x16x1xf32> to vector<16x1xf32>
    %20 = vector.broadcast %19 : vector<16x1xf32> to vector<16x1024xf32>
    %21 = arith.addf %17, %20 : vector<16x1024xf32>
    %cst_17 = arith.constant 0.000000e+00 : f32
    %22 = vector.broadcast %cst_17 : f32 to vector<16x1024xf32>
    %23 = arith.maximumf %21, %22 : vector<16x1024xf32>
    %24 = arith.truncf %23 : vector<16x1024xf32> to vector<16x1024xbf16>
    %c0_18 = arith.constant 0 : index
    %c0_19 = arith.constant 0 : index
    %c0_20 = arith.constant 0 : index
    %25 = vector.load %arg8[%c0_18, %c0_19, %c0_20] : memref<2x32x16xbf16, #tpu.memory_space<vmem>>, vector<1x32x16xbf16>
    %26 = vector.shape_cast %25 : vector<1x32x16xbf16> to vector<32x16xbf16>
    %cst_21 = arith.constant dense<0.000000e+00> : vector<32x1024xf32>
    %27 = tpu.matmul %26, %24, %cst_21 {dimension_numbers = #tpu.dot_dimension_numbers<[1], [0], [0], [1], [0, 0, 1, 1], [], []>} : vector<32x16xbf16>, vector<16x1024xbf16>, vector<32x1024xf32> -> vector<32x1024xf32>
    %c0_22 = arith.constant 0 : index
    %c0_23 = arith.constant 0 : index
    %c0_24 = arith.constant 0 : index
    %28 = vector.load %arg9[%c0_22, %c0_23, %c0_24] : memref<2x32x1xf32, #tpu.memory_space<vmem>>, vector<1x32x1xf32>
    %29 = vector.shape_cast %28 : vector<1x32x1xf32> to vector<32x1xf32>
    %30 = vector.broadcast %29 : vector<32x1xf32> to vector<32x1024xf32>
    %31 = arith.addf %27, %30 : vector<32x1024xf32>
    %32 = arith.addf %31, %13 : vector<32x1024xf32>
    %cst_25 = arith.constant 0.000000e+00 : f32
    %33 = vector.broadcast %cst_25 : f32 to vector<32x1024xf32>
    %34 = arith.maximumf %32, %33 : vector<32x1024xf32>
    %35 = arith.truncf %34 : vector<32x1024xf32> to vector<32x1024xbf16>
    %c1 = arith.constant 1 : index
    %c0_26 = arith.constant 0 : index
    %c0_27 = arith.constant 0 : index
    %36 = vector.load %arg6[%c1, %c0_26, %c0_27] : memref<2x16x32xbf16, #tpu.memory_space<vmem>>, vector<1x16x32xbf16>
    %37 = vector.shape_cast %36 : vector<1x16x32xbf16> to vector<16x32xbf16>
    %cst_28 = arith.constant dense<0.000000e+00> : vector<16x1024xf32>
    %38 = tpu.matmul %37, %35, %cst_28 {dimension_numbers = #tpu.dot_dimension_numbers<[1], [0], [0], [1], [0, 0, 1, 1], [], []>} : vector<16x32xbf16>, vector<32x1024xbf16>, vector<16x1024xf32> -> vector<16x1024xf32>
    %c1_29 = arith.constant 1 : index
    %c0_30 = arith.constant 0 : index
    %c0_31 = arith.constant 0 : index
    %39 = vector.load %arg7[%c1_29, %c0_30, %c0_31] : memref<2x16x1xf32, #tpu.memory_space<vmem>>, vector<1x16x1xf32>
    %40 = vector.shape_cast %39 : vector<1x16x1xf32> to vector<16x1xf32>
    %41 = vector.broadcast %40 : vector<16x1xf32> to vector<16x1024xf32>
    %42 = arith.addf %38, %41 : vector<16x1024xf32>
    %cst_32 = arith.constant 0.000000e+00 : f32
    %43 = vector.broadcast %cst_32 : f32 to vector<16x1024xf32>
    %44 = arith.maximumf %42, %43 : vector<16x1024xf32>
    %45 = arith.truncf %44 : vector<16x1024xf32> to vector<16x1024xbf16>
    %c1_33 = arith.constant 1 : index
    %c0_34 = arith.constant 0 : index
    %c0_35 = arith.constant 0 : index
    %46 = vector.load %arg8[%c1_33, %c0_34, %c0_35] : memref<2x32x16xbf16, #tpu.memory_space<vmem>>, vector<1x32x16xbf16>
    %47 = vector.shape_cast %46 : vector<1x32x16xbf16> to vector<32x16xbf16>
    %cst_36 = arith.constant dense<0.000000e+00> : vector<32x1024xf32>
    %48 = tpu.matmul %47, %45, %cst_36 {dimension_numbers = #tpu.dot_dimension_numbers<[1], [0], [0], [1], [0, 0, 1, 1], [], []>} : vector<32x16xbf16>, vector<16x1024xbf16>, vector<32x1024xf32> -> vector<32x1024xf32>
    %c1_37 = arith.constant 1 : index
    %c0_38 = arith.constant 0 : index
    %c0_39 = arith.constant 0 : index
    %49 = vector.load %arg9[%c1_37, %c0_38, %c0_39] : memref<2x32x1xf32, #tpu.memory_space<vmem>>, vector<1x32x1xf32>
    %50 = vector.shape_cast %49 : vector<1x32x1xf32> to vector<32x1xf32>
    %51 = vector.broadcast %50 : vector<32x1xf32> to vector<32x1024xf32>
    %52 = arith.addf %48, %51 : vector<32x1024xf32>
    %53 = arith.addf %52, %34 : vector<32x1024xf32>
    %cst_40 = arith.constant 0.000000e+00 : f32
    %54 = vector.broadcast %cst_40 : f32 to vector<32x1024xf32>
    %55 = arith.maximumf %53, %54 : vector<32x1024xf32>
    %56 = arith.truncf %55 : vector<32x1024xf32> to vector<32x1024xbf16>
    %c0_41 = arith.constant 0 : index
    %c0_42 = arith.constant 0 : index
    %57 = vector.load %arg10[%c0_41, %c0_42] : memref<16x32xbf16, #tpu.memory_space<vmem>>, vector<16x32xbf16>
    %cst_43 = arith.constant dense<0.000000e+00> : vector<16x1024xf32>
    %58 = tpu.matmul %57, %56, %cst_43 {dimension_numbers = #tpu.dot_dimension_numbers<[1], [0], [0], [1], [0, 0, 1, 1], [], []>} : vector<16x32xbf16>, vector<32x1024xbf16>, vector<16x1024xf32> -> vector<16x1024xf32>
    %c0_44 = arith.constant 0 : index
    %c0_45 = arith.constant 0 : index
    %59 = vector.load %arg11[%c0_44, %c0_45] : memref<16x1xf32, #tpu.memory_space<vmem>>, vector<16x1xf32>
    %60 = vector.broadcast %59 : vector<16x1xf32> to vector<16x1024xf32>
    %61 = arith.addf %58, %60 : vector<16x1024xf32>
    %cst_46 = arith.constant 0.000000e+00 : f32
    %62 = vector.broadcast %cst_46 : f32 to vector<16x1024xf32>
    %63 = arith.maximumf %61, %62 : vector<16x1024xf32>
    %64 = arith.truncf %63 : vector<16x1024xf32> to vector<16x1024xbf16>
    %c0_47 = arith.constant 0 : index
    %c0_48 = arith.constant 0 : index
    %65 = vector.load %arg12[%c0_47, %c0_48] : memref<4x16xbf16, #tpu.memory_space<vmem>>, vector<4x16xbf16>
    %cst_49 = arith.constant dense<0.000000e+00> : vector<4x1024xf32>
    %66 = tpu.matmul %65, %64, %cst_49 {dimension_numbers = #tpu.dot_dimension_numbers<[1], [0], [0], [1], [0, 0, 1, 1], [], []>} : vector<4x16xbf16>, vector<16x1024xbf16>, vector<4x1024xf32> -> vector<4x1024xf32>
    %c0_50 = arith.constant 0 : index
    %c0_51 = arith.constant 0 : index
    %67 = vector.load %arg13[%c0_50, %c0_51] : memref<4x1xf32, #tpu.memory_space<vmem>>, vector<4x1xf32>
    %68 = vector.broadcast %67 : vector<4x1xf32> to vector<4x1024xf32>
    %69 = arith.addf %66, %68 : vector<4x1024xf32>
    %c0_52 = arith.constant 0 : index
    %c0_53 = arith.constant 0 : index
    %c0_54 = arith.constant 0 : index
    %70 = vector.load %arg14[%c0_52, %c0_53, %c0_54] : memref<1x4x1024xf32, #tpu.memory_space<vmem>>, vector<1x4x1024xf32>
    %71 = vector.shape_cast %70 : vector<1x4x1024xf32> to vector<4x1024xf32>
    %72 = vector.shape_cast %69 : vector<4x1024xf32> to vector<1x4x1024xf32>
    tpu.vector_store %arg14[%c0_52, %c0_53, %c0_54], %72 {strides = array<i32>} : memref<1x4x1024xf32, #tpu.memory_space<vmem>>, vector<1x4x1024xf32>,
    return
  }
  func.func @transform_0(%arg0: i32, %arg1: i32) -> (i32, i32, i32) {
    %c0_i32 = arith.constant 0 : i32
    %c0_i32_0 = arith.constant 0 : i32
    return %arg0, %c0_i32, %arg1 : i32, i32, i32
  }
  func.func @transform_1(%arg0: i32, %arg1: i32) -> (i32, i32, i32) {
    %c0_i32 = arith.constant 0 : i32
    %c0_i32_0 = arith.constant 0 : i32
    return %arg0, %c0_i32, %arg1 : i32, i32, i32
  }
  func.func @transform_2(%arg0: i32, %arg1: i32) -> (i32, i32) {
    %c0_i32 = arith.constant 0 : i32
    %c0_i32_0 = arith.constant 0 : i32
    %c0_i32_1 = arith.constant 0 : i32
    return %c0_i32, %c0_i32_0 : i32, i32
  }
  func.func @transform_3(%arg0: i32, %arg1: i32) -> (i32, i32) {
    %c0_i32 = arith.constant 0 : i32
    %c0_i32_0 = arith.constant 0 : i32
    %c0_i32_1 = arith.constant 0 : i32
    return %c0_i32, %c0_i32_0 : i32, i32
  }
  func.func @transform_4(%arg0: i32, %arg1: i32) -> (i32, i32, i32) {
    %c0_i32 = arith.constant 0 : i32
    %c0_i32_0 = arith.constant 0 : i32
    %c0_i32_1 = arith.constant 0 : i32
    %c0_i32_2 = arith.constant 0 : i32
    return %c0_i32, %c0_i32_0, %c0_i32_1 : i32, i32, i32
  }
  func.func @transform_5(%arg0: i32, %arg1: i32) -> (i32, i32, i32) {
    %c0_i32 = arith.constant 0 : i32
    %c0_i32_0 = arith.constant 0 : i32
    %c0_i32_1 = arith.constant 0 : i32
    %c0_i32_2 = arith.constant 0 : i32
    return %c0_i32, %c0_i32_0, %c0_i32_1 : i32, i32, i32
  }
  func.func @transform_6(%arg0: i32, %arg1: i32) -> (i32, i32, i32) {
    %c0_i32 = arith.constant 0 : i32
    %c0_i32_0 = arith.constant 0 : i32
    %c0_i32_1 = arith.constant 0 : i32
    %c0_i32_2 = arith.constant 0 : i32
    return %c0_i32, %c0_i32_0, %c0_i32_1 : i32, i32, i32
  }
  func.func @transform_7(%arg0: i32, %arg1: i32) -> (i32, i32, i32) {
    %c0_i32 = arith.constant 0 : i32
    %c0_i32_0 = arith.constant 0 : i32
    %c0_i32_1 = arith.constant 0 : i32
    %c0_i32_2 = arith.constant 0 : i32
    return %c0_i32, %c0_i32_0, %c0_i32_1 : i32, i32, i32
  }
  func.func @transform_8(%arg0: i32, %arg1: i32) -> (i32, i32) {
    %c0_i32 = arith.constant 0 : i32
    %c0_i32_0 = arith.constant 0 : i32
    %c0_i32_1 = arith.constant 0 : i32
    return %c0_i32, %c0_i32_0 : i32, i32
  }
  func.func @transform_9(%arg0: i32, %arg1: i32) -> (i32, i32) {
    %c0_i32 = arith.constant 0 : i32
    %c0_i32_0 = arith.constant 0 : i32
    %c0_i32_1 = arith.constant 0 : i32
    return %c0_i32, %c0_i32_0 : i32, i32
  }
  func.func @transform_10(%arg0: i32, %arg1: i32) -> (i32, i32) {
    %c0_i32 = arith.constant 0 : i32
    %c0_i32_0 = arith.constant 0 : i32
    %c0_i32_1 = arith.constant 0 : i32
    return %c0_i32, %c0_i32_0 : i32, i32
  }
  func.func @transform_11(%arg0: i32, %arg1: i32) -> (i32, i32) {
    %c0_i32 = arith.constant 0 : i32
    %c0_i32_0 = arith.constant 0 : i32
    %c0_i32_1 = arith.constant 0 : i32
    return %c0_i32, %c0_i32_0 : i32, i32
  }
  func.func @transform_12(%arg0: i32, %arg1: i32) -> (i32, i32, i32) {
    %c0_i32 = arith.constant 0 : i32
    %c0_i32_0 = arith.constant 0 : i32
    return %arg0, %c0_i32, %arg1 : i32, i32, i32
  }
}

</mosaic_0001>

<llo_original>
// kernel: tpu_custom_call.1
$region0: #{tpu_custom_call.1}
  #allocation0 [shape = 'u32[]', space=smem, size = 0x4, offset = 0x4, fixed_abs, tag = 'smem constant byte address 0x4 - core index']
  #allocation1 [shape = 'u32[144,128]{1,0:T(1,128)}', space=vmem, size = 0x12000, scoped, tag = 'internal scratch']
  %s0 = inlined_call_operand.vmem [shape: f32[2,3,1024], index: 0, kind: input, shape index: {}]
  %s1 = inlined_call_operand.vmem [shape: f32[2,1,1024], index: 1, kind: input, shape index: {}]
  %s2 = inlined_call_operand.vmem [shape: bf16[32,3], index: 2, kind: input, shape index: {}]
  %s3 = inlined_call_operand.vmem [shape: f32[32,1], index: 3, kind: input, shape index: {}]
  %s4 = inlined_call_operand.vmem [shape: bf16[2,16,32], index: 4, kind: input, shape index: {}]
  %s5 = inlined_call_operand.vmem [shape: f32[2,16,1], index: 5, kind: input, shape index: {}]
  %s6 = inlined_call_operand.vmem [shape: bf16[2,32,16], index: 6, kind: input, shape index: {}]
  %s7 = inlined_call_operand.vmem [shape: f32[2,32,1], index: 7, kind: input, shape index: {}]
  %s8 = inlined_call_operand.vmem [shape: bf16[16,32], index: 8, kind: input, shape index: {}]
  %s9 = inlined_call_operand.vmem [shape: f32[16,1], index: 9, kind: input, shape index: {}]
  %s10 = inlined_call_operand.vmem [shape: bf16[4,16], index: 10, kind: input, shape index: {}]
  %s11 = inlined_call_operand.vmem [shape: f32[4,1], index: 11, kind: input, shape index: {}]
  %s12 = inlined_call_operand.hbm [shape: f32[2,4,1024], index: 12, kind: output, shape index: {}]
  %s13 = sld [smem:[#allocation0]]
  $region81: #{tpu_custom_call.1} parent=0
    _
  %s15 = ssub.s32 1, %s13
  %s16 = scalar_select 0, %s15, %s13
  $region1: #{tpu_custom_call.1} parent=0
    #allocation2 [shape = 'u8[32768]{0}', space=vmem, size = 0x8000, scoped, tag = 'output window, operand 0']
    #allocation3 [shape = 's32[2]{0}', space=sflag, size = 0x8, scoped, tag = 'scoped memory for tpu_custom_call.1']
    %17 = vsyncpa [#allocation3], 0
    %s18 = scalar_lea.sflag [#allocation3], 1
    %19 = vsyncpa %s18, 0
    loop: start=0, step=1, limit=4
    $region2: #{tpu_custom_call.1} parent=1 // loop_pre_header
      _
    $region3: #{tpu_custom_call.1} parent=1 // loop_header
      %s21 = sphi 0, %s25
      %p22 = scmp.ge.s32.totalorder %s21, 4
      %s28 = sphi 0, %s40
      %s29 = sphi 0, %s36
      %s30 = sphi 0, %s28
      %s31 = sphi 0, %s29
      %s32 = sphi 0, %s30
      %s33 = sphi 0, %s31
      %s45 = sphi 0, %s47
      %s48 = sphi 0, %s45
      %s49 = sphi 0, %s48
      %s65 = sphi 0, %s49
      %s73 = sphi 0, %s75
      %s76 = sphi 0, %s73
      %s77 = sphi 0, %s76
      %s93 = sphi 0, %s77
      %s97 = sphi 0, %s97
      %s99 = sphi 0, %s97
      %s100 = sphi 0, %s99
      %s114 = sphi 0, %s100
      %s118 = sphi 0, %s118
      %s120 = sphi 0, %s118
      %s121 = sphi 0, %s120
      %s135 = sphi 0, %s121
      %s139 = sphi 0, %s139
      %s141 = sphi 0, %s139
      %s142 = sphi 0, %s141
      %s156 = sphi 0, %s142
      %s160 = sphi 0, %s160
      %s162 = sphi 0, %s160
      %s163 = sphi 0, %s162
      %s177 = sphi 0, %s163
      %s181 = sphi 0, %s181
      %s183 = sphi 0, %s181
      %s184 = sphi 0, %s183
      %s198 = sphi 0, %s184
      %s202 = sphi 0, %s202
      %s204 = sphi 0, %s202
      %s205 = sphi 0, %s204
      %s219 = sphi 0, %s205
      %s223 = sphi 0, %s223
      %s225 = sphi 0, %s223
      %s226 = sphi 0, %s225
      %s240 = sphi 0, %s226
      %s244 = sphi 0, %s244
      %s246 = sphi 0, %s244
      %s247 = sphi 0, %s246
      %s261 = sphi 0, %s247
      %s265 = sphi 0, %s265
      %s267 = sphi 0, %s265
      %s268 = sphi 0, %s267
      %s282 = sphi 0, %s268
      %s286 = sphi 0, %s286
      %s288 = sphi 0, %s286
      %s289 = sphi 0, %s288
      %s303 = sphi 0, %s289
      %s311 = sphi 0, %s313
      %s314 = sphi 0, %s311
      %s315 = sphi 0, %s314
      %s331 = sphi 0, %s315
    $region4: #{tpu_custom_call.1} parent=1 // loop_header_branch
      %24 = sbr.rel (%p22) target = $region8
    $region5: #{tpu_custom_call.1} parent=1 // loop_body
      %s26 = ssub.s32 %s21, 1
      %s27 = ssub.s32 %s21, 2
      %s34 = sadd.s32 1, %s29
      %p35 = scmp.ge.s32.totalorder %s34, 1
      %s36 = scalar_select %p35, 0, %s34
      %s37 = sadd.s32 1, %s28
      %s38 = scalar_select %p35, %s37, %s28
      %p39 = scmp.ge.s32.totalorder %s38, 2
      %s40 = scalar_select %p39, 0, %s38
      %s41 = ssub.s32 %s28, %s40
      %s42 = ssub.s32 %s29, %s36
      %s43 = sor.u32 %s41, %s42
      %p44 = scmp.eq.s32.totalorder %s43, 0
      %s46 = sadd.s32 %s45, 1
      %s47 = scalar_select %p44, %s45, %s46
      %p50 = pneg %p44
      %p51 = scmp.eq.s32.totalorder %s21, 1
      %p52 = por %p50, %p51
      %p53 = scmp.ne.s32.totalorder %s45, %s48
      %p54 = scmp.eq.s32.totalorder %s21, 0
      %p55 = por %p53, %p54
      %p56 = scmp.ne.s32.totalorder %s45, %s48
      %p57 = scmp.eq.s32.totalorder %s26, 1
      %p58 = por %p56, %p57
      %p59 = scmp.ne.s32.totalorder %s48, %s49
      %p60 = scmp.eq.s32.totalorder %s26, 0
      %p61 = por %p59, %p60
      %p62 = scmp.ne.s32.totalorder %s48, %s49
      %p63 = scmp.eq.s32.totalorder %s27, 1
      %p64 = por %p62, %p63
      %p66 = scmp.ne.s32.totalorder %s49, %s65
      %p67 = scmp.eq.s32.totalorder %s27, 0
      %p68 = por %p66, %p67
      %s69 = ssub.s32 %s28, %s40
      %s70 = ssub.s32 %s29, %s36
      %s71 = sor.u32 %s69, %s70
      %p72 = scmp.eq.s32.totalorder %s71, 0
      %s74 = sadd.s32 %s73, 1
      %s75 = scalar_select %p72, %s73, %s74
      %p78 = pneg %p72
      %p79 = scmp.eq.s32.totalorder %s21, 1
      %p80 = por %p78, %p79
      %p81 = scmp.ne.s32.totalorder %s73, %s76
      %p82 = scmp.eq.s32.totalorder %s21, 0
      %p83 = por %p81, %p82
      %p84 = scmp.ne.s32.totalorder %s73, %s76
      %p85 = scmp.eq.s32.totalorder %s26, 1
      %p86 = por %p84, %p85
      %p87 = scmp.ne.s32.totalorder %s76, %s77
      %p88 = scmp.eq.s32.totalorder %s26, 0
      %p89 = por %p87, %p88
      %p90 = scmp.ne.s32.totalorder %s76, %s77
      %p91 = scmp.eq.s32.totalorder %s27, 1
      %p92 = por %p90, %p91
      %p94 = scmp.ne.s32.totalorder %s77, %s93
      %p95 = scmp.eq.s32.totalorder %s27, 0
      %p96 = por %p94, %p95
      %s98 = sadd.s32 %s97, 1
      %p101 = scmp.eq.s32.totalorder %s21, 1
      %p102 = scmp.ne.s32.totalorder %s97, %s99
      %p103 = scmp.eq.s32.totalorder %s21, 0
      %p104 = por %p102, %p103
      %p105 = scmp.ne.s32.totalorder %s97, %s99
      %p106 = scmp.eq.s32.totalorder %s26, 1
      %p107 = por %p105, %p106
      %p108 = scmp.ne.s32.totalorder %s99, %s100
      %p109 = scmp.eq.s32.totalorder %s26, 0
      %p110 = por %p108, %p109
      %p111 = scmp.ne.s32.totalorder %s99, %s100
      %p112 = scmp.eq.s32.totalorder %s27, 1
      %p113 = por %p111, %p112
      %p115 = scmp.ne.s32.totalorder %s100, %s114
      %p116 = scmp.eq.s32.totalorder %s27, 0
      %p117 = por %p115, %p116
      %s119 = sadd.s32 %s118, 1
      %p122 = scmp.eq.s32.totalorder %s21, 1
      %p123 = scmp.ne.s32.totalorder %s118, %s120
      %p124 = scmp.eq.s32.totalorder %s21, 0
      %p125 = por %p123, %p124
      %p126 = scmp.ne.s32.totalorder %s118, %s120
      %p127 = scmp.eq.s32.totalorder %s26, 1
      %p128 = por %p126, %p127
      %p129 = scmp.ne.s32.totalorder %s120, %s121
      %p130 = scmp.eq.s32.totalorder %s26, 0
      %p131 = por %p129, %p130
      %p132 = scmp.ne.s32.totalorder %s120, %s121
      %p133 = scmp.eq.s32.totalorder %s27, 1
      %p134 = por %p132, %p133
      %p136 = scmp.ne.s32.totalorder %s121, %s135
      %p137 = scmp.eq.s32.totalorder %s27, 0
      %p138 = por %p136, %p137
      %s140 = sadd.s32 %s139, 1
      %p143 = scmp.eq.s32.totalorder %s21, 1
      %p144 = scmp.ne.s32.totalorder %s139, %s141
      %p145 = scmp.eq.s32.totalorder %s21, 0
      %p146 = por %p144, %p145
      %p147 = scmp.ne.s32.totalorder %s139, %s141
      %p148 = scmp.eq.s32.totalorder %s26, 1
      %p149 = por %p147, %p148
      %p150 = scmp.ne.s32.totalorder %s141, %s142
      %p151 = scmp.eq.s32.totalorder %s26, 0
      %p152 = por %p150, %p151
      %p153 = scmp.ne.s32.totalorder %s141, %s142
      %p154 = scmp.eq.s32.totalorder %s27, 1
      %p155 = por %p153, %p154
      %p157 = scmp.ne.s32.totalorder %s142, %s156
      %p158 = scmp.eq.s32.totalorder %s27, 0
      %p159 = por %p157, %p158
      %s161 = sadd.s32 %s160, 1
      %p164 = scmp.eq.s32.totalorder %s21, 1
      %p165 = scmp.ne.s32.totalorder %s160, %s162
      %p166 = scmp.eq.s32.totalorder %s21, 0
      %p167 = por %p165, %p166
      %p168 = scmp.ne.s32.totalorder %s160, %s162
      %p169 = scmp.eq.s32.totalorder %s26, 1
      %p170 = por %p168, %p169
      %p171 = scmp.ne.s32.totalorder %s162, %s163
      %p172 = scmp.eq.s32.totalorder %s26, 0
      %p173 = por %p171, %p172
      %p174 = scmp.ne.s32.totalorder %s162, %s163
      %p175 = scmp.eq.s32.totalorder %s27, 1
      %p176 = por %p174, %p175
      %p178 = scmp.ne.s32.totalorder %s163, %s177
      %p179 = scmp.eq.s32.totalorder %s27, 0
      %p180 = por %p178, %p179
      %s182 = sadd.s32 %s181, 1
      %p185 = scmp.eq.s32.totalorder %s21, 1
      %p186 = scmp.ne.s32.totalorder %s181, %s183
      %p187 = scmp.eq.s32.totalorder %s21, 0
      %p188 = por %p186, %p187
      %p189 = scmp.ne.s32.totalorder %s181, %s183
      %p190 = scmp.eq.s32.totalorder %s26, 1
      %p191 = por %p189, %p190
      %p192 = scmp.ne.s32.totalorder %s183, %s184
      %p193 = scmp.eq.s32.totalorder %s26, 0
      %p194 = por %p192, %p193
      %p195 = scmp.ne.s32.totalorder %s183, %s184
      %p196 = scmp.eq.s32.totalorder %s27, 1
      %p197 = por %p195, %p196
      %p199 = scmp.ne.s32.totalorder %s184, %s198
      %p200 = scmp.eq.s32.totalorder %s27, 0
      %p201 = por %p199, %p200
      %s203 = sadd.s32 %s202, 1
      %p206 = scmp.eq.s32.totalorder %s21, 1
      %p207 = scmp.ne.s32.totalorder %s202, %s204
      %p208 = scmp.eq.s32.totalorder %s21, 0
      %p209 = por %p207, %p208
      %p210 = scmp.ne.s32.totalorder %s202, %s204
      %p211 = scmp.eq.s32.totalorder %s26, 1
      %p212 = por %p210, %p211
      %p213 = scmp.ne.s32.totalorder %s204, %s205
      %p214 = scmp.eq.s32.totalorder %s26, 0
      %p215 = por %p213, %p214
      %p216 = scmp.ne.s32.totalorder %s204, %s205
      %p217 = scmp.eq.s32.totalorder %s27, 1
      %p218 = por %p216, %p217
      %p220 = scmp.ne.s32.totalorder %s205, %s219
      %p221 = scmp.eq.s32.totalorder %s27, 0
      %p222 = por %p220, %p221
      %s224 = sadd.s32 %s223, 1
      %p227 = scmp.eq.s32.totalorder %s21, 1
      %p228 = scmp.ne.s32.totalorder %s223, %s225
      %p229 = scmp.eq.s32.totalorder %s21, 0
      %p230 = por %p228, %p229
      %p231 = scmp.ne.s32.totalorder %s223, %s225
      %p232 = scmp.eq.s32.totalorder %s26, 1
      %p233 = por %p231, %p232
      %p234 = scmp.ne.s32.totalorder %s225, %s226
      %p235 = scmp.eq.s32.totalorder %s26, 0
      %p236 = por %p234, %p235
      %p237 = scmp.ne.s32.totalorder %s225, %s226
      %p238 = scmp.eq.s32.totalorder %s27, 1
      %p239 = por %p237, %p238
      %p241 = scmp.ne.s32.totalorder %s226, %s240
      %p242 = scmp.eq.s32.totalorder %s27, 0
      %p243 = por %p241, %p242
      %s245 = sadd.s32 %s244, 1
      %p248 = scmp.eq.s32.totalorder %s21, 1
      %p249 = scmp.ne.s32.totalorder %s244, %s246
      %p250 = scmp.eq.s32.totalorder %s21, 0
      %p251 = por %p249, %p250
      %p252 = scmp.ne.s32.totalorder %s244, %s246
      %p253 = scmp.eq.s32.totalorder %s26, 1
      %p254 = por %p252, %p253
      %p255 = scmp.ne.s32.totalorder %s246, %s247
      %p256 = scmp.eq.s32.totalorder %s26, 0
      %p257 = por %p255, %p256
      %p258 = scmp.ne.s32.totalorder %s246, %s247
      %p259 = scmp.eq.s32.totalorder %s27, 1
      %p260 = por %p258, %p259
      %p262 = scmp.ne.s32.totalorder %s247, %s261
      %p263 = scmp.eq.s32.totalorder %s27, 0
      %p264 = por %p262, %p263
      %s266 = sadd.s32 %s265, 1
      %p269 = scmp.eq.s32.totalorder %s21, 1
      %p270 = scmp.ne.s32.totalorder %s265, %s267
      %p271 = scmp.eq.s32.totalorder %s21, 0
      %p272 = por %p270, %p271
      %p273 = scmp.ne.s32.totalorder %s265, %s267
      %p274 = scmp.eq.s32.totalorder %s26, 1
      %p275 = por %p273, %p274
      %p276 = scmp.ne.s32.totalorder %s267, %s268
      %p277 = scmp.eq.s32.totalorder %s26, 0
      %p278 = por %p276, %p277
      %p279 = scmp.ne.s32.totalorder %s267, %s268
      %p280 = scmp.eq.s32.totalorder %s27, 1
      %p281 = por %p279, %p280
      %p283 = scmp.ne.s32.totalorder %s268, %s282
      %p284 = scmp.eq.s32.totalorder %s27, 0
      %p285 = por %p283, %p284
      %s287 = sadd.s32 %s286, 1
      %p290 = scmp.eq.s32.totalorder %s21, 1
      %p291 = scmp.ne.s32.totalorder %s286, %s288
      %p292 = scmp.eq.s32.totalorder %s21, 0
      %p293 = por %p291, %p292
      %p294 = scmp.ne.s32.totalorder %s286, %s288
      %p295 = scmp.eq.s32.totalorder %s26, 1
      %p296 = por %p294, %p295
      %p297 = scmp.ne.s32.totalorder %s288, %s289
      %p298 = scmp.eq.s32.totalorder %s26, 0
      %p299 = por %p297, %p298
      %p300 = scmp.ne.s32.totalorder %s288, %s289
      %p301 = scmp.eq.s32.totalorder %s27, 1
      %p302 = por %p300, %p301
      %p304 = scmp.ne.s32.totalorder %s289, %s303
      %p305 = scmp.eq.s32.totalorder %s27, 0
      %p306 = por %p304, %p305
      %s307 = ssub.s32 %s28, %s40
      %s308 = ssub.s32 %s29, %s36
      %s309 = sor.u32 %s307, %s308
      %p310 = scmp.eq.s32.totalorder %s309, 0
      %s312 = sadd.s32 %s311, 1
      %s313 = scalar_select %p310, %s311, %s312
      %p316 = pneg %p310
      %p317 = scmp.eq.s32.totalorder %s21, 1
      %p318 = por %p316, %p317
      %p319 = scmp.ne.s32.totalorder %s311, %s314
      %p320 = scmp.eq.s32.totalorder %s21, 0
      %p321 = por %p319, %p320
      %p322 = scmp.ne.s32.totalorder %s311, %s314
      %p323 = scmp.eq.s32.totalorder %s26, 1
      %p324 = por %p322, %p323
      %p325 = scmp.ne.s32.totalorder %s314, %s315
      %p326 = scmp.eq.s32.totalorder %s26, 0
      %p327 = por %p325, %p326
      %p328 = scmp.ne.s32.totalorder %s314, %s315
      %p329 = scmp.eq.s32.totalorder %s27, 1
      %p330 = por %p328, %p329
      %p332 = scmp.ne.s32.totalorder %s315, %s331
      %p333 = scmp.eq.s32.totalorder %s27, 0
      %p334 = por %p332, %p333
      %p335 = scmp.le.s32.totalorder 1, %s21
      %p336 = scmp.lt.s32.totalorder %s21, 3
      %p337 = pnand %p335, %p336
      %p338 = pneg %p337
      // Predicated region
      $region9: #{tpu_custom_call.1} parent=5 // pred_check
        _
      $region10: #{tpu_custom_call.1} parent=5 // pred_check_branch
        %340 = sbr.rel (%p337) target = $region12
      $region11: #{tpu_custom_call.1} parent=5 // pred_region
        %s341 = ssub.s32 %s21, 1
        // Predicated region
        $region13: #{tpu_custom_call.1} parent=11 // pred_check
          %p342 = pneg %p110
        $region14: #{tpu_custom_call.1} parent=11 // pred_check_branch
          %344 = sbr.rel (%p342) target = $region16
        $region15: #{tpu_custom_call.1} parent=11 // pred_region
          _
        $region16: #{tpu_custom_call.1} parent=11 // pred_fallthru
          _
        // Predicated region
        $region17: #{tpu_custom_call.1} parent=11 // pred_check
          %p345 = pneg %p131
        $region18: #{tpu_custom_call.1} parent=11 // pred_check_branch
          %347 = sbr.rel (%p345) target = $region20
        $region19: #{tpu_custom_call.1} parent=11 // pred_region
          _
        $region20: #{tpu_custom_call.1} parent=11 // pred_fallthru
          _
        // Predicated region
        $region21: #{tpu_custom_call.1} parent=11 // pred_check
          %p348 = pneg %p152
        $region22: #{tpu_custom_call.1} parent=11 // pred_check_branch
          %350 = sbr.rel (%p348) target = $region24
        $region23: #{tpu_custom_call.1} parent=11 // pred_region
          _
        $region24: #{tpu_custom_call.1} parent=11 // pred_fallthru
          _
        // Predicated region
        $region25: #{tpu_custom_call.1} parent=11 // pred_check
          %p351 = pneg %p173
        $region26: #{tpu_custom_call.1} parent=11 // pred_check_branch
          %353 = sbr.rel (%p351) target = $region28
        $region27: #{tpu_custom_call.1} parent=11 // pred_region
          _
        $region28: #{tpu_custom_call.1} parent=11 // pred_fallthru
          _
        // Predicated region
        $region29: #{tpu_custom_call.1} parent=11 // pred_check
          %p354 = pneg %p194
        $region30: #{tpu_custom_call.1} parent=11 // pred_check_branch
          %356 = sbr.rel (%p354) target = $region32
        $region31: #{tpu_custom_call.1} parent=11 // pred_region
          _
        $region32: #{tpu_custom_call.1} parent=11 // pred_fallthru
          _
        // Predicated region
        $region33: #{tpu_custom_call.1} parent=11 // pred_check
          %p357 = pneg %p215
        $region34: #{tpu_custom_call.1} parent=11 // pred_check_branch
          %359 = sbr.rel (%p357) target = $region36
        $region35: #{tpu_custom_call.1} parent=11 // pred_region
          _
        $region36: #{tpu_custom_call.1} parent=11 // pred_fallthru
          _
        // Predicated region
        $region37: #{tpu_custom_call.1} parent=11 // pred_check
          %p360 = pneg %p236
        $region38: #{tpu_custom_call.1} parent=11 // pred_check_branch
          %362 = sbr.rel (%p360) target = $region40
        $region39: #{tpu_custom_call.1} parent=11 // pred_region
          _
        $region40: #{tpu_custom_call.1} parent=11 // pred_fallthru
          _
        // Predicated region
        $region41: #{tpu_custom_call.1} parent=11 // pred_check
          %p363 = pneg %p257
        $region42: #{tpu_custom_call.1} parent=11 // pred_check_branch
          %365 = sbr.rel (%p363) target = $region44
        $region43: #{tpu_custom_call.1} parent=11 // pred_region
          _
        $region44: #{tpu_custom_call.1} parent=11 // pred_fallthru
          _
        // Predicated region
        $region45: #{tpu_custom_call.1} parent=11 // pred_check
          %p366 = pneg %p278
        $region46: #{tpu_custom_call.1} parent=11 // pred_check_branch
          %368 = sbr.rel (%p366) target = $region48
        $region47: #{tpu_custom_call.1} parent=11 // pred_region
          _
        $region48: #{tpu_custom_call.1} parent=11 // pred_fallthru
          _
        // Predicated region
        $region49: #{tpu_custom_call.1} parent=11 // pred_check
          %p369 = pneg %p299
        $region50: #{tpu_custom_call.1} parent=11 // pred_check_branch
          %371 = sbr.rel (%p369) target = $region52
        $region51: #{tpu_custom_call.1} parent=11 // pred_region
          _
        $region52: #{tpu_custom_call.1} parent=11 // pred_fallthru
          _
      $region12: #{tpu_custom_call.1} parent=5 // pred_fallthru
        _
      %p372 = scmp.lt.s32.totalorder %s21, 2
      // Predicated region
      $region53: #{tpu_custom_call.1} parent=5 // pred_check
        %p373 = pneg %p372
      $region54: #{tpu_custom_call.1} parent=5 // pred_check_branch
        %375 = sbr.rel (%p373) target = $region56
      $region55: #{tpu_custom_call.1} parent=5 // pred_region
        // Predicated region
        $region57: #{tpu_custom_call.1} parent=55 // pred_check
          %p376 = pneg %p55
        $region58: #{tpu_custom_call.1} parent=55 // pred_check_branch
          %378 = sbr.rel (%p376) target = $region60
        $region59: #{tpu_custom_call.1} parent=55 // pred_region
          %s379 = smul.u32 8, %s29
          %p380 = scmp.lt.s32.totalorder %s28, 1
          %s381 = scalar_select %p380, %s28, 1
          %p382 = scmp.lt.s32.totalorder %s379, 7
          %s383 = scalar_select %p382, %s379, 7
          %s384 = smul.addr %s381, 8
          %s385 = sadd.s32 %s383, %s384
          %s386 = smul.addr %s385, 4
          %s387 = scalar_lea.vmem %s0, %s386
          %s388 = smul.u32 8, %s29
        $region60: #{tpu_custom_call.1} parent=55 // pred_fallthru
          _
        // Predicated region
        $region61: #{tpu_custom_call.1} parent=55 // pred_check
          %p389 = pneg %p83
        $region62: #{tpu_custom_call.1} parent=55 // pred_check_branch
          %391 = sbr.rel (%p389) target = $region64
        $region63: #{tpu_custom_call.1} parent=55 // pred_region
          %s392 = smul.u32 8, %s29
          %p393 = scmp.lt.s32.totalorder %s28, 1
          %s394 = scalar_select %p393, %s28, 1
          %p395 = scmp.lt.s32.totalorder %s392, 7
          %s396 = scalar_select %p395, %s392, 7
          %s397 = smul.addr %s394, 8
          %s398 = sadd.s32 %s396, %s397
          %s399 = scalar_lea.vmem %s1, %s398
          %s400 = smul.u32 8, %s29
        $region64: #{tpu_custom_call.1} parent=55 // pred_fallthru
          _
      $region56: #{tpu_custom_call.1} parent=5 // pred_fallthru
        _
      %p401 = scmp.le.s32.totalorder 1, %s21
      %p402 = scmp.lt.s32.totalorder %s21, 3
      %p403 = pnand %p401, %p402
      %p404 = pneg %p403
      // Predicated region
      $region65: #{tpu_custom_call.1} parent=5 // pred_check
        _
      $region66: #{tpu_custom_call.1} parent=5 // pred_check_branch
        %406 = sbr.rel (%p403) target = $region68
      $region67: #{tpu_custom_call.1} parent=5 // pred_region
        %s407 = ssub.s32 %s21, 1
        %s408 = smul.u32 8, %s31
        %p409 = scmp.lt.s32.totalorder %s30, 1
        %s410 = scalar_select %p409, %s30, 1
        %p411 = scmp.lt.s32.totalorder %s408, 7
        %s412 = scalar_select %p411, %s408, 7
        %s413 = smul.addr %s410, 8
        %s414 = sadd.s32 %s412, %s413
        %s415 = smul.addr %s414, 4
        %s416 = scalar_lea.vmem %s0, %s415
        %p417 = pneg %p61
        %p418 = pneg %p58
        %s419 = smul.u32 8, %s31
        %p420 = scmp.lt.s32.totalorder %s30, 1
        %s421 = scalar_select %p420, %s30, 1
        %p422 = scmp.lt.s32.totalorder %s419, 7
        %s423 = scalar_select %p422, %s419, 7
        %s424 = smul.addr %s421, 8
        %s425 = sadd.s32 %s423, %s424
        %s426 = scalar_lea.vmem %s1, %s425
        %p427 = pneg %p89
        %p428 = pneg %p86
        %p429 = pneg %p110
        %p430 = pneg %p107
        %p431 = pneg %p131
        %p432 = pneg %p128
        %p433 = pneg %p152
        %p434 = pneg %p149
        %p435 = pneg %p173
        %p436 = pneg %p170
        %p437 = pneg %p194
        %p438 = pneg %p191
        %p439 = pneg %p215
        %p440 = pneg %p212
        %p441 = pneg %p236
        %p442 = pneg %p233
        %p443 = pneg %p257
        %p444 = pneg %p254
        %p445 = pneg %p278
        %p446 = pneg %p275
        %p447 = pneg %p299
        %p448 = pneg %p296
        %p449 = pneg %p327
        %p450 = pneg %p324
        %s451 = sand.u32 %s314, 1
        %s452 = scalar_lea.sflag [#allocation3], %s451
        %s453 = sand.u32 %s314, 1
        %s454 = smul.addr %s453, 32
        %s455 = scalar_lea.vmem [#allocation2], %s454
        %s456 = smul.u32 8, %s31
        %p457 = scmp.lt.s32.totalorder %s30, 1
        %s458 = scalar_select %p457, %s30, 1
        %p459 = scmp.lt.s32.totalorder %s456, 7
        %s460 = scalar_select %p459, %s456, 7
        %s461 = smul.addr %s458, 8
        %s462 = sadd.s32 %s460, %s461
        %s463 = smul.addr %s462, 4
        %s464 = scalar_lea.vmem %s0, %s463
        %s465 = smul.u32 8, %s31
        %s466 = smul.u32 8, %s31
        %p467 = scmp.lt.s32.totalorder %s30, 1
        %s468 = scalar_select %p467, %s30, 1
        %p469 = scmp.lt.s32.totalorder %s466, 7
        %s470 = scalar_select %p469, %s466, 7
        %s471 = smul.addr %s468, 8
        %s472 = sadd.s32 %s470, %s471
        %s473 = scalar_lea.vmem %s1, %s472
        %s474 = smul.u32 8, %s31
        %s475 = smul.u32 8, %s31
        %v477 = vld [vmem:[%s464] sm:$0x77]
        %v478 = vld [vmem:[%s464 + $0x8] sm:$0x77]
        %v479 = vld [vmem:[%s464 + $0x10] sm:$0x77]
        %v480 = vld [vmem:[%s464 + $0x18] sm:$0x77]
        %v481 = vld [vmem:[%s473] sm:$0xff]
        %v483 = vlaneseq
        %v484 = vshrl.u32 %v483, 7
        %v485 = vsub.s32 0, %v484
        %v486 = vrot.slane %v481, %v485
        %v487 = vlaneseq
        %v488 = vshrl.u32 %v487, 7
        %v489 = vsub.s32 1, %v488
        %v490 = vrot.slane %v481, %v489
        %v491 = vlaneseq
        %v492 = vshrl.u32 %v491, 7
        %v493 = vsub.s32 2, %v492
        %v494 = vrot.slane %v481, %v493
        %v495 = vlaneseq
        %v496 = vshrl.u32 %v495, 7
        %v497 = vsub.s32 3, %v496
        %v498 = vrot.slane %v481, %v497
        %v499 = vlaneseq
        %v500 = vshrl.u32 %v499, 7
        %v501 = vsub.s32 4, %v500
        %v502 = vrot.slane %v481, %v501
        %v503 = vlaneseq
        %v504 = vshrl.u32 %v503, 7
        %v505 = vsub.s32 5, %v504
        %v506 = vrot.slane %v481, %v505
        %v507 = vlaneseq
        %v508 = vshrl.u32 %v507, 7
        %v509 = vsub.s32 6, %v508
        %v510 = vrot.slane %v481, %v509
        %v511 = vlaneseq
        %v512 = vshrl.u32 %v511, 7
        %v513 = vsub.s32 7, %v512
        %v514 = vrot.slane %v481, %v513
        %v515 = vcombine.low %v486, %v490
        %v516 = vcombine.low %v494, %v498
        %v517 = vcombine.low %v502, %v506
        %v518 = vcombine.low %v510, %v514
        %v523 = vmul.f32 %v477, %v515
        %v524 = vmul.f32 %v478, %v516
        %v525 = vmul.f32 %v479, %v517
        %v526 = vmul.f32 %v480, %v518
        %v531 = vcombine.high %v523, %v523
        %v532 = vcombine.high %v524, %v524
        %v533 = vcombine.high %v525, %v525
        %v534 = vcombine.high %v526, %v526
        %v539 = vpack.c.bf16 %v523, %v523
        %v540 = vpack.c.bf16 %v531, %v531
        %v541 = vpack.c.bf16 %v524, %v524
        %v542 = vpack.c.bf16 %v532, %v532
        %v543 = vpack.c.bf16 %v525, %v525
        %v544 = vpack.c.bf16 %v533, %v533
        %v545 = vpack.c.bf16 %v526, %v526
        %v546 = vpack.c.bf16 %v534, %v534
        %v547 = vld [vmem:[%s2] sm:$0xf]
        %v548 = vld [vmem:[%s2 + $0x4] sm:$0xf]
        %v549 = vld [vmem:[%s2 + $0x8] sm:$0xf]
        %v550 = vld [vmem:[%s2 + $0xc] sm:$0xf]
        %v551 = vld [vmem:[%s3] sm:$0xff]
        %v552 = vld [vmem:[%s3 + $0x8] sm:$0xff]
        %v553 = vld [vmem:[%s3 + $0x10] sm:$0xff]
        %v554 = vld [vmem:[%s3 + $0x18] sm:$0xff]
        %556 = vset.pattern.permute.xlu0 0
        %557 = vperm.xlu0 %556, %v551
        %v558 = vpop.permute.xlu0 %557
        %561 = vset.pattern.permute.xlu0 0
        %562 = vperm.xlu0 %561, %v552
        %v563 = vpop.permute.xlu0 %562
        %566 = vset.pattern.permute.xlu0 0
        %567 = vperm.xlu0 %566, %v553
        %v568 = vpop.permute.xlu0 %567
        %571 = vset.pattern.permute.xlu0 0
        %572 = vperm.xlu0 %571, %v554
        %v573 = vpop.permute.xlu0 %572
        %v579 = vunpack.c.l.b16 %v547
        %v580 = vunpack.c.l.b16 %v548
        %v581 = vunpack.c.l.b16 %v549
        %v582 = vunpack.c.l.b16 %v550
        %v583 = vpack.c.b16 %v580, %v579
        %v584 = vpack.c.b16 %v582, %v581
        %vm585 = vcmask 23552
        %v587 = vsel %vm585, %v583, 0
        %v590 = vsel %vm585, %v584, 0
        %vm592 = vcmask 1040384
        %vm593 = vcmask 1041408
        %v594 = vsel %vm592, 4294967295, 65535
        %v595 = vsel %vm593, %v594, 0
        %v597 = vand.u32 %v539, %v595
        %v600 = vand.u32 %v540, %v595
        %v603 = vand.u32 %v541, %v595
        %v606 = vand.u32 %v542, %v595
        %v609 = vand.u32 %v543, %v595
        %v612 = vand.u32 %v544, %v595
        %v615 = vand.u32 %v545, %v595
        %v618 = vand.u32 %v546, %v595
        %620 = vmatprep.subr.bf16.mxu0 %v600
        %621 = vmatpush1.bf16.msra.mxu0 %v597
        %622 = vmatprep.subr.bf16.mxu0 0
        %623 = vmatpush1.bf16.msra.mxu0 0
        %624 = vmatprep.subr.bf16.mxu0 0
        %625 = vmatpush1.bf16.msra.mxu0 0
        %626 = vmatprep.subr.bf16.mxu0 0
        %627 = vmatpush1.bf16.msra.mxu0 0
        %628 = vmatprep.subr.bf16.mxu0 0
        %629 = vmatpush1.bf16.msra.mxu0 0
        %630 = vmatprep.subr.bf16.mxu0 0
        %631 = vmatpush1.bf16.msra.mxu0 0
        %632 = vmatprep.subr.bf16.mxu0 0
        %633 = vmatpush1.bf16.msra.mxu0 0
        %634 = vmatprep.subr.bf16.mxu0 0
        %635 = vmatpush1.bf16.msra.mxu0 0
        %636 = vmatprep.subr.bf16.mxu0 0
        %637 = vmatpush1.bf16.msra.mxu0 0
        %638 = vmatprep.subr.bf16.mxu0 0
        %639 = vmatpush1.bf16.msra.mxu0 0
        %640 = vmatprep.subr.bf16.mxu0 0
        %641 = vmatpush1.bf16.msra.mxu0 0
        %642 = vmatprep.subr.bf16.mxu0 0
        %643 = vmatpush1.bf16.msra.mxu0 0
        %644 = vmatprep.subr.bf16.mxu0 0
        %645 = vmatpush1.bf16.msra.mxu0 0
        %646 = vmatprep.subr.bf16.mxu0 0
        %647 = vmatpush1.bf16.msra.mxu0 0
        %648 = vmatprep.subr.bf16.mxu0 0
        %649 = vmatpush1.bf16.msra.mxu0 0
        %650 = vmatprep.subr.bf16.mxu0 0
        %651 = vmatpush1.bf16.msra.mxu0 0
        %652 = vmatprep.mubr.bf16.mxu0 0
        %653 = vmatmul.mubr.bf16.gmra.mrb[0].mxu0 %v587
        %v654 = vpop.f32.mrb[0].mxu0
        %v655 = vadd.f32 %v558, %v654
        %v656 = vpop.f32.mrb[0].mxu0
        %v657 = vadd.f32 %v558, %v656
        %v658 = vpop.f32.mrb[0].mxu0
        %v659 = vadd.f32 %v563, %v658
        %v660 = vpop.f32.mrb[0].mxu0
        %v661 = vadd.f32 %v563, %v660
        %662 = vmatprep.mubr.bf16.mxu0 0
        %663 = vmatmul.mubr.bf16.gmra.mrb[0].mxu0 %v590
        %v664 = vpop.f32.mrb[0].mxu0
        %v665 = vadd.f32 %v568, %v664
        %v666 = vpop.f32.mrb[0].mxu0
        %v667 = vadd.f32 %v568, %v666
        %v668 = vpop.f32.mrb[0].mxu0
        %v669 = vadd.f32 %v573, %v668
        %v670 = vpop.f32.mrb[0].mxu0
        %v671 = vadd.f32 %v573, %v670
        %672 = vdwg.mxu0
        %673 = vmatprep.subr.bf16.mxu0 %v606
        %674 = vmatpush1.bf16.msra.mxu0 %v603
        %675 = vmatprep.subr.bf16.mxu0 0
        %676 = vmatpush1.bf16.msra.mxu0 0
        %677 = vmatprep.subr.bf16.mxu0 0
        %678 = vmatpush1.bf16.msra.mxu0 0
        %679 = vmatprep.subr.bf16.mxu0 0
        %680 = vmatpush1.bf16.msra.mxu0 0
        %681 = vmatprep.subr.bf16.mxu0 0
        %682 = vmatpush1.bf16.msra.mxu0 0
        %683 = vmatprep.subr.bf16.mxu0 0
        %684 = vmatpush1.bf16.msra.mxu0 0
        %685 = vmatprep.subr.bf16.mxu0 0
        %686 = vmatpush1.bf16.msra.mxu0 0
        %687 = vmatprep.subr.bf16.mxu0 0
        %688 = vmatpush1.bf16.msra.mxu0 0
        %689 = vmatprep.subr.bf16.mxu0 0
        %690 = vmatpush1.bf16.msra.mxu0 0
        %691 = vmatprep.subr.bf16.mxu0 0
        %692 = vmatpush1.bf16.msra.mxu0 0
        %693 = vmatprep.subr.bf16.mxu0 0
        %694 = vmatpush1.bf16.msra.mxu0 0
        %695 = vmatprep.subr.bf16.mxu0 0
        %696 = vmatpush1.bf16.msra.mxu0 0
        %697 = vmatprep.subr.bf16.mxu0 0
        %698 = vmatpush1.bf16.msra.mxu0 0
        %699 = vmatprep.subr.bf16.mxu0 0
        %700 = vmatpush1.bf16.msra.mxu0 0
        %701 = vmatprep.subr.bf16.mxu0 0
        %702 = vmatpush1.bf16.msra.mxu0 0
        %703 = vmatprep.subr.bf16.mxu0 0
        %704 = vmatpush1.bf16.msra.mxu0 0
        %705 = vmatprep.mubr.bf16.mxu0 0
        %706 = vmatmul.mubr.bf16.gmra.mrb[0].mxu0 %v587
        %v707 = vpop.f32.mrb[0].mxu0
        %v708 = vadd.f32 %v558, %v707
        %v709 = vpop.f32.mrb[0].mxu0
        %v710 = vadd.f32 %v558, %v709
        %v711 = vpop.f32.mrb[0].mxu0
        %v712 = vadd.f32 %v563, %v711
        %v713 = vpop.f32.mrb[0].mxu0
        %v714 = vadd.f32 %v563, %v713
        %715 = vmatprep.mubr.bf16.mxu0 0
        %716 = vmatmul.mubr.bf16.gmra.mrb[0].mxu0 %v590
        %v717 = vpop.f32.mrb[0].mxu0
        %v718 = vadd.f32 %v568, %v717
        %v719 = vpop.f32.mrb[0].mxu0
        %v720 = vadd.f32 %v568, %v719
        %v721 = vpop.f32.mrb[0].mxu0
        %v722 = vadd.f32 %v573, %v721
        %v723 = vpop.f32.mrb[0].mxu0
        %v724 = vadd.f32 %v573, %v723
        %725 = vdwg.mxu0
        %726 = vmatprep.subr.bf16.mxu0 %v612
        %727 = vmatpush1.bf16.msra.mxu0 %v609
        %728 = vmatprep.subr.bf16.mxu0 0
        %729 = vmatpush1.bf16.msra.mxu0 0
        %730 = vmatprep.subr.bf16.mxu0 0
        %731 = vmatpush1.bf16.msra.mxu0 0
        %732 = vmatprep.subr.bf16.mxu0 0
        %733 = vmatpush1.bf16.msra.mxu0 0
        %734 = vmatprep.subr.bf16.mxu0 0
        %735 = vmatpush1.bf16.msra.mxu0 0
        %736 = vmatprep.subr.bf16.mxu0 0
        %737 = vmatpush1.bf16.msra.mxu0 0
        %738 = vmatprep.subr.bf16.mxu0 0
        %739 = vmatpush1.bf16.msra.mxu0 0
        %740 = vmatprep.subr.bf16.mxu0 0
        %741 = vmatpush1.bf16.msra.mxu0 0
        %742 = vmatprep.subr.bf16.mxu0 0
        %743 = vmatpush1.bf16.msra.mxu0 0
        %744 = vmatprep.subr.bf16.mxu0 0
        %745 = vmatpush1.bf16.msra.mxu0 0
        %746 = vmatprep.subr.bf16.mxu0 0
        %747 = vmatpush1.bf16.msra.mxu0 0
        %748 = vmatprep.subr.bf16.mxu0 0
        %749 = vmatpush1.bf16.msra.mxu0 0
        %750 = vmatprep.subr.bf16.mxu0 0
        %751 = vmatpush1.bf16.msra.mxu0 0
        %752 = vmatprep.subr.bf16.mxu0 0
        %753 = vmatpush1.bf16.msra.mxu0 0
        %754 = vmatprep.subr.bf16.mxu0 0
        %755 = vmatpush1.bf16.msra.mxu0 0
        %756 = vmatprep.subr.bf16.mxu0 0
        %757 = vmatpush1.bf16.msra.mxu0 0
        %758 = vmatprep.mubr.bf16.mxu0 0
        %759 = vmatmul.mubr.bf16.gmra.mrb[0].mxu0 %v587
        %v760 = vpop.f32.mrb[0].mxu0
        %v761 = vadd.f32 %v558, %v760
        %v762 = vpop.f32.mrb[0].mxu0
        %v763 = vadd.f32 %v558, %v762
        %v764 = vpop.f32.mrb[0].mxu0
        %v765 = vadd.f32 %v563, %v764
        %v766 = vpop.f32.mrb[0].mxu0
        %v767 = vadd.f32 %v563, %v766
        %768 = vmatprep.mubr.bf16.mxu0 0
        %769 = vmatmul.mubr.bf16.gmra.mrb[0].mxu0 %v590
        %v770 = vpop.f32.mrb[0].mxu0
        %v771 = vadd.f32 %v568, %v770
        %v772 = vpop.f32.mrb[0].mxu0
        %v773 = vadd.f32 %v568, %v772
        %v774 = vpop.f32.mrb[0].mxu0
        %v775 = vadd.f32 %v573, %v774
        %v776 = vpop.f32.mrb[0].mxu0
        %v777 = vadd.f32 %v573, %v776
        %778 = vdwg.mxu0
        %779 = vmatprep.subr.bf16.mxu0 %v618
        %780 = vmatpush1.bf16.msra.mxu0 %v615
        %781 = vmatprep.subr.bf16.mxu0 0
        %782 = vmatpush1.bf16.msra.mxu0 0
        %783 = vmatprep.subr.bf16.mxu0 0
        %784 = vmatpush1.bf16.msra.mxu0 0
        %785 = vmatprep.subr.bf16.mxu0 0
        %786 = vmatpush1.bf16.msra.mxu0 0
        %787 = vmatprep.subr.bf16.mxu0 0
        %788 = vmatpush1.bf16.msra.mxu0 0
        %789 = vmatprep.subr.bf16.mxu0 0
        %790 = vmatpush1.bf16.msra.mxu0 0
        %791 = vmatprep.subr.bf16.mxu0 0
        %792 = vmatpush1.bf16.msra.mxu0 0
        %793 = vmatprep.subr.bf16.mxu0 0
        %794 = vmatpush1.bf16.msra.mxu0 0
        %795 = vmatprep.subr.bf16.mxu0 0
        %796 = vmatpush1.bf16.msra.mxu0 0
        %797 = vmatprep.subr.bf16.mxu0 0
        %798 = vmatpush1.bf16.msra.mxu0 0
        %799 = vmatprep.subr.bf16.mxu0 0
        %800 = vmatpush1.bf16.msra.mxu0 0
        %801 = vmatprep.subr.bf16.mxu0 0
        %802 = vmatpush1.bf16.msra.mxu0 0
        %803 = vmatprep.subr.bf16.mxu0 0
        %804 = vmatpush1.bf16.msra.mxu0 0
        %805 = vmatprep.subr.bf16.mxu0 0
        %806 = vmatpush1.bf16.msra.mxu0 0
        %807 = vmatprep.subr.bf16.mxu0 0
        %808 = vmatpush1.bf16.msra.mxu0 0
        %809 = vmatprep.subr.bf16.mxu0 0
        %810 = vmatpush1.bf16.msra.mxu0 0
        %811 = vmatprep.mubr.bf16.mxu0 0
        %812 = vmatmul.mubr.bf16.gmra.mrb[0].mxu0 %v587
        %v813 = vpop.f32.mrb[0].mxu0
        %v814 = vadd.f32 %v558, %v813
        %v815 = vpop.f32.mrb[0].mxu0
        %v816 = vadd.f32 %v558, %v815
        %v817 = vpop.f32.mrb[0].mxu0
        %v818 = vadd.f32 %v563, %v817
        %v819 = vpop.f32.mrb[0].mxu0
        %v820 = vadd.f32 %v563, %v819
        %821 = vmatprep.mubr.bf16.mxu0 0
        %822 = vmatmul.mubr.bf16.gmra.mrb[0].mxu0 %v590
        %v823 = vpop.f32.mrb[0].mxu0
        %v824 = vadd.f32 %v568, %v823
        %v825 = vpop.f32.mrb[0].mxu0
        %v826 = vadd.f32 %v568, %v825
        %v827 = vpop.f32.mrb[0].mxu0
        %v828 = vadd.f32 %v573, %v827
        %v829 = vpop.f32.mrb[0].mxu0
        %v830 = vadd.f32 %v573, %v829
        %831 = vdwg.mxu0
        %v832 = vmax.f32 %v655, 0.0
        %v833 = vmax.f32 %v657, 0.0
        %v834 = vmax.f32 %v708, 0.0
        %v835 = vmax.f32 %v710, 0.0
        %v836 = vmax.f32 %v761, 0.0
        %v837 = vmax.f32 %v763, 0.0
        %v838 = vmax.f32 %v814, 0.0
        %v839 = vmax.f32 %v816, 0.0
        %v840 = vmax.f32 %v659, 0.0
        %v841 = vmax.f32 %v661, 0.0
        %v842 = vmax.f32 %v712, 0.0
        %v843 = vmax.f32 %v714, 0.0
        %v844 = vmax.f32 %v765, 0.0
        %v845 = vmax.f32 %v767, 0.0
        %v846 = vmax.f32 %v818, 0.0
        %v847 = vmax.f32 %v820, 0.0
        %v848 = vmax.f32 %v665, 0.0
        %v849 = vmax.f32 %v667, 0.0
        %v850 = vmax.f32 %v718, 0.0
        %v851 = vmax.f32 %v720, 0.0
        %v852 = vmax.f32 %v771, 0.0
        %v853 = vmax.f32 %v773, 0.0
        %v854 = vmax.f32 %v824, 0.0
        %v855 = vmax.f32 %v826, 0.0
        %v856 = vmax.f32 %v669, 0.0
        %v857 = vmax.f32 %v671, 0.0
        %v858 = vmax.f32 %v722, 0.0
        %v859 = vmax.f32 %v724, 0.0
        %v860 = vmax.f32 %v775, 0.0
        %v861 = vmax.f32 %v777, 0.0
        %v862 = vmax.f32 %v828, 0.0
        %v863 = vmax.f32 %v830, 0.0
        %v864 = vpack.c.bf16 %v840, %v832
        %v865 = vpack.c.bf16 %v841, %v833
        %v866 = vpack.c.bf16 %v842, %v834
        %v867 = vpack.c.bf16 %v843, %v835
        %v868 = vpack.c.bf16 %v844, %v836
        %v869 = vpack.c.bf16 %v845, %v837
        %v870 = vpack.c.bf16 %v846, %v838
        %v871 = vpack.c.bf16 %v847, %v839
        %v872 = vpack.c.bf16 %v856, %v848
        %v873 = vpack.c.bf16 %v857, %v849
        %v874 = vpack.c.bf16 %v858, %v850
        %v875 = vpack.c.bf16 %v859, %v851
        %v876 = vpack.c.bf16 %v860, %v852
        %v877 = vpack.c.bf16 %v861, %v853
        %v878 = vpack.c.bf16 %v862, %v854
        %v879 = vpack.c.bf16 %v863, %v855
        %v880 = vld [vmem:[%s4] sm:$0xf]
        %v881 = vld [vmem:[%s4 + $0x4] sm:$0xf]
        %v882 = vld [vmem:[%s5] sm:$0xff]
        %v883 = vld [vmem:[%s5 + $0x8] sm:$0xff]
        %885 = vset.pattern.permute.xlu0 0
        %886 = vperm.xlu0 %885, %v882
        %v887 = vpop.permute.xlu0 %886
        %890 = vset.pattern.permute.xlu0 0
        %891 = vperm.xlu0 %890, %v883
        %v892 = vpop.permute.xlu0 %891
        %v896 = vunpack.c.l.b16 %v880
        %v897 = vunpack.c.l.b16 %v881
        %v898 = vpack.c.b16 %v897, %v896
        %vm899 = vcmask 261120
        %v901 = vsel %vm899, %v898, 0
        %903 = vmatprep.subr.bf16.mxu0 %v865
        %904 = vmatpush1.bf16.msra.mxu0 %v864
        %905 = vmatprep.subr.bf16.mxu0 %v873
        %906 = vmatpush1.bf16.msra.mxu0 %v872
        %907 = vmatprep.subr.bf16.mxu0 0
        %908 = vmatpush1.bf16.msra.mxu0 0
        %909 = vmatprep.subr.bf16.mxu0 0
        %910 = vmatpush1.bf16.msra.mxu0 0
        %911 = vmatprep.subr.bf16.mxu0 0
        %912 = vmatpush1.bf16.msra.mxu0 0
        %913 = vmatprep.subr.bf16.mxu0 0
        %914 = vmatpush1.bf16.msra.mxu0 0
        %915 = vmatprep.subr.bf16.mxu0 0
        %916 = vmatpush1.bf16.msra.mxu0 0
        %917 = vmatprep.subr.bf16.mxu0 0
        %918 = vmatpush1.bf16.msra.mxu0 0
        %919 = vmatprep.subr.bf16.mxu0 0
        %920 = vmatpush1.bf16.msra.mxu0 0
        %921 = vmatprep.subr.bf16.mxu0 0
        %922 = vmatpush1.bf16.msra.mxu0 0
        %923 = vmatprep.subr.bf16.mxu0 0
        %924 = vmatpush1.bf16.msra.mxu0 0
        %925 = vmatprep.subr.bf16.mxu0 0
        %926 = vmatpush1.bf16.msra.mxu0 0
        %927 = vmatprep.subr.bf16.mxu0 0
        %928 = vmatpush1.bf16.msra.mxu0 0
        %929 = vmatprep.subr.bf16.mxu0 0
        %930 = vmatpush1.bf16.msra.mxu0 0
        %931 = vmatprep.subr.bf16.mxu0 0
        %932 = vmatpush1.bf16.msra.mxu0 0
        %933 = vmatprep.subr.bf16.mxu0 0
        %934 = vmatpush1.bf16.msra.mxu0 0
        %935 = vmatprep.mubr.bf16.mxu0 0
        %936 = vmatmul.mubr.bf16.gmra.mrb[0].mxu0 %v901
        %v937 = vpop.f32.mrb[0].mxu0
        %v938 = vadd.f32 %v887, %v937
        %v939 = vpop.f32.mrb[0].mxu0
        %v940 = vadd.f32 %v887, %v939
        %v941 = vpop.f32.mrb[0].mxu0
        %v942 = vadd.f32 %v892, %v941
        %v943 = vpop.f32.mrb[0].mxu0
        %v944 = vadd.f32 %v892, %v943
        %945 = vdwg.mxu0
        %946 = vmatprep.subr.bf16.mxu0 %v867
        %947 = vmatpush1.bf16.msra.mxu0 %v866
        %948 = vmatprep.subr.bf16.mxu0 %v875
        %949 = vmatpush1.bf16.msra.mxu0 %v874
        %950 = vmatprep.subr.bf16.mxu0 0
        %951 = vmatpush1.bf16.msra.mxu0 0
        %952 = vmatprep.subr.bf16.mxu0 0
        %953 = vmatpush1.bf16.msra.mxu0 0
        %954 = vmatprep.subr.bf16.mxu0 0
        %955 = vmatpush1.bf16.msra.mxu0 0
        %956 = vmatprep.subr.bf16.mxu0 0
        %957 = vmatpush1.bf16.msra.mxu0 0
        %958 = vmatprep.subr.bf16.mxu0 0
        %959 = vmatpush1.bf16.msra.mxu0 0
        %960 = vmatprep.subr.bf16.mxu0 0
        %961 = vmatpush1.bf16.msra.mxu0 0
        %962 = vmatprep.subr.bf16.mxu0 0
        %963 = vmatpush1.bf16.msra.mxu0 0
        %964 = vmatprep.subr.bf16.mxu0 0
        %965 = vmatpush1.bf16.msra.mxu0 0
        %966 = vmatprep.subr.bf16.mxu0 0
        %967 = vmatpush1.bf16.msra.mxu0 0
        %968 = vmatprep.subr.bf16.mxu0 0
        %969 = vmatpush1.bf16.msra.mxu0 0
        %970 = vmatprep.subr.bf16.mxu0 0
        %971 = vmatpush1.bf16.msra.mxu0 0
        %972 = vmatprep.subr.bf16.mxu0 0
        %973 = vmatpush1.bf16.msra.mxu0 0
        %974 = vmatprep.subr.bf16.mxu0 0
        %975 = vmatpush1.bf16.msra.mxu0 0
        %976 = vmatprep.subr.bf16.mxu0 0
        %977 = vmatpush1.bf16.msra.mxu0 0
        %978 = vmatprep.mubr.bf16.mxu0 0
        %979 = vmatmul.mubr.bf16.gmra.mrb[0].mxu0 %v901
        %v980 = vpop.f32.mrb[0].mxu0
        %v981 = vadd.f32 %v887, %v980
        %v982 = vpop.f32.mrb[0].mxu0
        %v983 = vadd.f32 %v887, %v982
        %v984 = vpop.f32.mrb[0].mxu0
        %v985 = vadd.f32 %v892, %v984
        %v986 = vpop.f32.mrb[0].mxu0
        %v987 = vadd.f32 %v892, %v986
        %988 = vdwg.mxu0
        %989 = vmatprep.subr.bf16.mxu0 %v869
        %990 = vmatpush1.bf16.msra.mxu0 %v868
        %991 = vmatprep.subr.bf16.mxu0 %v877
        %992 = vmatpush1.bf16.msra.mxu0 %v876
        %993 = vmatprep.subr.bf16.mxu0 0
        %994 = vmatpush1.bf16.msra.mxu0 0
        %995 = vmatprep.subr.bf16.mxu0 0
        %996 = vmatpush1.bf16.msra.mxu0 0
        %997 = vmatprep.subr.bf16.mxu0 0
        %998 = vmatpush1.bf16.msra.mxu0 0
        %999 = vmatprep.subr.bf16.mxu0 0
        %1000 = vmatpush1.bf16.msra.mxu0 0
        %1001 = vmatprep.subr.bf16.mxu0 0
        %1002 = vmatpush1.bf16.msra.mxu0 0
        %1003 = vmatprep.subr.bf16.mxu0 0
        %1004 = vmatpush1.bf16.msra.mxu0 0
        %1005 = vmatprep.subr.bf16.mxu0 0
        %1006 = vmatpush1.bf16.msra.mxu0 0
        %1007 = vmatprep.subr.bf16.mxu0 0
        %1008 = vmatpush1.bf16.msra.mxu0 0
        %1009 = vmatprep.subr.bf16.mxu0 0
        %1010 = vmatpush1.bf16.msra.mxu0 0
        %1011 = vmatprep.subr.bf16.mxu0 0
        %1012 = vmatpush1.bf16.msra.mxu0 0
        %1013 = vmatprep.subr.bf16.mxu0 0
        %1014 = vmatpush1.bf16.msra.mxu0 0
        %1015 = vmatprep.subr.bf16.mxu0 0
        %1016 = vmatpush1.bf16.msra.mxu0 0
        %1017 = vmatprep.subr.bf16.mxu0 0
        %1018 = vmatpush1.bf16.msra.mxu0 0
        %1019 = vmatprep.subr.bf16.mxu0 0
        %1020 = vmatpush1.bf16.msra.mxu0 0
        %1021 = vmatprep.mubr.bf16.mxu0 0
        %1022 = vmatmul.mubr.bf16.gmra.mrb[0].mxu0 %v901
        %v1023 = vpop.f32.mrb[0].mxu0
        %v1024 = vadd.f32 %v887, %v1023
        %v1025 = vpop.f32.mrb[0].mxu0
        %v1026 = vadd.f32 %v887, %v1025
        %v1027 = vpop.f32.mrb[0].mxu0
        %v1028 = vadd.f32 %v892, %v1027
        %v1029 = vpop.f32.mrb[0].mxu0
        %v1030 = vadd.f32 %v892, %v1029
        %1031 = vdwg.mxu0
        %1032 = vmatprep.subr.bf16.mxu0 %v871
        %1033 = vmatpush1.bf16.msra.mxu0 %v870
        %1034 = vmatprep.subr.bf16.mxu0 %v879
        %1035 = vmatpush1.bf16.msra.mxu0 %v878
        %1036 = vmatprep.subr.bf16.mxu0 0
        %1037 = vmatpush1.bf16.msra.mxu0 0
        %1038 = vmatprep.subr.bf16.mxu0 0
        %1039 = vmatpush1.bf16.msra.mxu0 0
        %1040 = vmatprep.subr.bf16.mxu0 0
        %1041 = vmatpush1.bf16.msra.mxu0 0
        %1042 = vmatprep.subr.bf16.mxu0 0
        %1043 = vmatpush1.bf16.msra.mxu0 0
        %1044 = vmatprep.subr.bf16.mxu0 0
        %1045 = vmatpush1.bf16.msra.mxu0 0
        %1046 = vmatprep.subr.bf16.mxu0 0
        %1047 = vmatpush1.bf16.msra.mxu0 0
        %1048 = vmatprep.subr.bf16.mxu0 0
        %1049 = vmatpush1.bf16.msra.mxu0 0
        %1050 = vmatprep.subr.bf16.mxu0 0
        %1051 = vmatpush1.bf16.msra.mxu0 0
        %1052 = vmatprep.subr.bf16.mxu0 0
        %1053 = vmatpush1.bf16.msra.mxu0 0
        %1054 = vmatprep.subr.bf16.mxu0 0
        %1055 = vmatpush1.bf16.msra.mxu0 0
        %1056 = vmatprep.subr.bf16.mxu0 0
        %1057 = vmatpush1.bf16.msra.mxu0 0
        %1058 = vmatprep.subr.bf16.mxu0 0
        %1059 = vmatpush1.bf16.msra.mxu0 0
        %1060 = vmatprep.subr.bf16.mxu0 0
        %1061 = vmatpush1.bf16.msra.mxu0 0
        %1062 = vmatprep.subr.bf16.mxu0 0
        %1063 = vmatpush1.bf16.msra.mxu0 0
        %1064 = vmatprep.mubr.bf16.mxu0 0
        %1065 = vmatmul.mubr.bf16.gmra.mrb[0].mxu0 %v901
        %v1066 = vpop.f32.mrb[0].mxu0
        %v1067 = vadd.f32 %v887, %v1066
        %v1068 = vpop.f32.mrb[0].mxu0
        %v1069 = vadd.f32 %v887, %v1068
        %v1070 = vpop.f32.mrb[0].mxu0
        %v1071 = vadd.f32 %v892, %v1070
        %v1072 = vpop.f32.mrb[0].mxu0
        %v1073 = vadd.f32 %v892, %v1072
        %1074 = vdwg.mxu0
        %v1075 = vmax.f32 %v938, 0.0
        %v1076 = vmax.f32 %v940, 0.0
        %v1077 = vmax.f32 %v981, 0.0
        %v1078 = vmax.f32 %v983, 0.0
        %v1079 = vmax.f32 %v1024, 0.0
        %v1080 = vmax.f32 %v1026, 0.0
        %v1081 = vmax.f32 %v1067, 0.0
        %v1082 = vmax.f32 %v1069, 0.0
        %v1083 = vmax.f32 %v942, 0.0
        %v1084 = vmax.f32 %v944, 0.0
        %v1085 = vmax.f32 %v985, 0.0
        %v1086 = vmax.f32 %v987, 0.0
        %v1087 = vmax.f32 %v1028, 0.0
        %v1088 = vmax.f32 %v1030, 0.0
        %v1089 = vmax.f32 %v1071, 0.0
        %v1090 = vmax.f32 %v1073, 0.0
        %v1091 = vpack.c.bf16 %v1083, %v1075
        %v1092 = vpack.c.bf16 %v1084, %v1076
        %v1093 = vpack.c.bf16 %v1085, %v1077
        %v1094 = vpack.c.bf16 %v1086, %v1078
        %v1095 = vpack.c.bf16 %v1087, %v1079
        %v1096 = vpack.c.bf16 %v1088, %v1080
        %v1097 = vpack.c.bf16 %v1089, %v1081
        %v1098 = vpack.c.bf16 %v1090, %v1082
        %v1099 = vld [vmem:[%s6] sm:$0xf]
        %v1100 = vld [vmem:[%s6 + $0x4] sm:$0xf]
        %v1101 = vld [vmem:[%s6 + $0x8] sm:$0xf]
        %v1102 = vld [vmem:[%s6 + $0xc] sm:$0xf]
        %v1103 = vld [vmem:[%s7] sm:$0xff]
        %v1104 = vld [vmem:[%s7 + $0x8] sm:$0xff]
        %v1105 = vld [vmem:[%s7 + $0x10] sm:$0xff]
        %v1106 = vld [vmem:[%s7 + $0x18] sm:$0xff]
        %1108 = vset.pattern.permute.xlu0 0
        %1109 = vperm.xlu0 %1108, %v1103
        %v1110 = vpop.permute.xlu0 %1109
        %1113 = vset.pattern.permute.xlu0 0
        %1114 = vperm.xlu0 %1113, %v1104
        %v1115 = vpop.permute.xlu0 %1114
        %1118 = vset.pattern.permute.xlu0 0
        %1119 = vperm.xlu0 %1118, %v1105
        %v1120 = vpop.permute.xlu0 %1119
        %1123 = vset.pattern.permute.xlu0 0
        %1124 = vperm.xlu0 %1123, %v1106
        %v1125 = vpop.permute.xlu0 %1124
        %v1131 = vunpack.c.l.b16 %v1099
        %v1132 = vunpack.c.l.b16 %v1100
        %v1133 = vunpack.c.l.b16 %v1101
        %v1134 = vunpack.c.l.b16 %v1102
        %v1135 = vpack.c.b16 %v1132, %v1131
        %v1136 = vpack.c.b16 %v1134, %v1133
        %vm1137 = vcmask 130048
        %v1139 = vsel %vm1137, %v1135, 0
        %v1142 = vsel %vm1137, %v1136, 0
        %1144 = vmatprep.subr.bf16.mxu0 %v1092
        %1145 = vmatpush1.bf16.msra.mxu0 %v1091
        %1146 = vmatprep.subr.bf16.mxu0 0
        %1147 = vmatpush1.bf16.msra.mxu0 0
        %1148 = vmatprep.subr.bf16.mxu0 0
        %1149 = vmatpush1.bf16.msra.mxu0 0
        %1150 = vmatprep.subr.bf16.mxu0 0
        %1151 = vmatpush1.bf16.msra.mxu0 0
        %1152 = vmatprep.subr.bf16.mxu0 0
        %1153 = vmatpush1.bf16.msra.mxu0 0
        %1154 = vmatprep.subr.bf16.mxu0 0
        %1155 = vmatpush1.bf16.msra.mxu0 0
        %1156 = vmatprep.subr.bf16.mxu0 0
        %1157 = vmatpush1.bf16.msra.mxu0 0
        %1158 = vmatprep.subr.bf16.mxu0 0
        %1159 = vmatpush1.bf16.msra.mxu0 0
        %1160 = vmatprep.subr.bf16.mxu0 0
        %1161 = vmatpush1.bf16.msra.mxu0 0
        %1162 = vmatprep.subr.bf16.mxu0 0
        %1163 = vmatpush1.bf16.msra.mxu0 0
        %1164 = vmatprep.subr.bf16.mxu0 0
        %1165 = vmatpush1.bf16.msra.mxu0 0
        %1166 = vmatprep.subr.bf16.mxu0 0
        %1167 = vmatpush1.bf16.msra.mxu0 0
        %1168 = vmatprep.subr.bf16.mxu0 0
        %1169 = vmatpush1.bf16.msra.mxu0 0
        %1170 = vmatprep.subr.bf16.mxu0 0
        %1171 = vmatpush1.bf16.msra.mxu0 0
        %1172 = vmatprep.subr.bf16.mxu0 0
        %1173 = vmatpush1.bf16.msra.mxu0 0
        %1174 = vmatprep.subr.bf16.mxu0 0
        %1175 = vmatpush1.bf16.msra.mxu0 0
        %1176 = vmatprep.mubr.bf16.mxu0 0
        %1177 = vmatmul.mubr.bf16.gmra.mrb[0].mxu0 %v1139
        %v1178 = vpop.f32.mrb[0].mxu0
        %v1179 = vadd.f32 %v1110, %v1178
        %v1180 = vpop.f32.mrb[0].mxu0
        %v1181 = vadd.f32 %v1110, %v1180
        %v1182 = vpop.f32.mrb[0].mxu0
        %v1183 = vadd.f32 %v1115, %v1182
        %v1184 = vpop.f32.mrb[0].mxu0
        %v1185 = vadd.f32 %v1115, %v1184
        %1186 = vmatprep.mubr.bf16.mxu0 0
        %1187 = vmatmul.mubr.bf16.gmra.mrb[0].mxu0 %v1142
        %v1188 = vpop.f32.mrb[0].mxu0
        %v1189 = vadd.f32 %v1120, %v1188
        %v1190 = vpop.f32.mrb[0].mxu0
        %v1191 = vadd.f32 %v1120, %v1190
        %v1192 = vpop.f32.mrb[0].mxu0
        %v1193 = vadd.f32 %v1125, %v1192
        %v1194 = vpop.f32.mrb[0].mxu0
        %v1195 = vadd.f32 %v1125, %v1194
        %1196 = vdwg.mxu0
        %1197 = vmatprep.subr.bf16.mxu0 %v1094
        %1198 = vmatpush1.bf16.msra.mxu0 %v1093
        %1199 = vmatprep.subr.bf16.mxu0 0
        %1200 = vmatpush1.bf16.msra.mxu0 0
        %1201 = vmatprep.subr.bf16.mxu0 0
        %1202 = vmatpush1.bf16.msra.mxu0 0
        %1203 = vmatprep.subr.bf16.mxu0 0
        %1204 = vmatpush1.bf16.msra.mxu0 0
        %1205 = vmatprep.subr.bf16.mxu0 0
        %1206 = vmatpush1.bf16.msra.mxu0 0
        %1207 = vmatprep.subr.bf16.mxu0 0
        %1208 = vmatpush1.bf16.msra.mxu0 0
        %1209 = vmatprep.subr.bf16.mxu0 0
        %1210 = vmatpush1.bf16.msra.mxu0 0
        %1211 = vmatprep.subr.bf16.mxu0 0
        %1212 = vmatpush1.bf16.msra.mxu0 0
        %1213 = vmatprep.subr.bf16.mxu0 0
        %1214 = vmatpush1.bf16.msra.mxu0 0
        %1215 = vmatprep.subr.bf16.mxu0 0
        %1216 = vmatpush1.bf16.msra.mxu0 0
        %1217 = vmatprep.subr.bf16.mxu0 0
        %1218 = vmatpush1.bf16.msra.mxu0 0
        %1219 = vmatprep.subr.bf16.mxu0 0
        %1220 = vmatpush1.bf16.msra.mxu0 0
        %1221 = vmatprep.subr.bf16.mxu0 0
        %1222 = vmatpush1.bf16.msra.mxu0 0
        %1223 = vmatprep.subr.bf16.mxu0 0
        %1224 = vmatpush1.bf16.msra.mxu0 0
        %1225 = vmatprep.subr.bf16.mxu0 0
        %1226 = vmatpush1.bf16.msra.mxu0 0
        %1227 = vmatprep.subr.bf16.mxu0 0
        %1228 = vmatpush1.bf16.msra.mxu0 0
        %1229 = vmatprep.mubr.bf16.mxu0 0
        %1230 = vmatmul.mubr.bf16.gmra.mrb[0].mxu0 %v1139
        %v1231 = vpop.f32.mrb[0].mxu0
        %v1232 = vadd.f32 %v1110, %v1231
        %v1233 = vpop.f32.mrb[0].mxu0
        %v1234 = vadd.f32 %v1110, %v1233
        %v1235 = vpop.f32.mrb[0].mxu0
        %v1236 = vadd.f32 %v1115, %v1235
        %v1237 = vpop.f32.mrb[0].mxu0
        %v1238 = vadd.f32 %v1115, %v1237
        %1239 = vmatprep.mubr.bf16.mxu0 0
        %1240 = vmatmul.mubr.bf16.gmra.mrb[0].mxu0 %v1142
        %v1241 = vpop.f32.mrb[0].mxu0
        %v1242 = vadd.f32 %v1120, %v1241
        %v1243 = vpop.f32.mrb[0].mxu0
        %v1244 = vadd.f32 %v1120, %v1243
        %v1245 = vpop.f32.mrb[0].mxu0
        %v1246 = vadd.f32 %v1125, %v1245
        %v1247 = vpop.f32.mrb[0].mxu0
        %v1248 = vadd.f32 %v1125, %v1247
        %1249 = vdwg.mxu0
        %1250 = vmatprep.subr.bf16.mxu0 %v1096
        %1251 = vmatpush1.bf16.msra.mxu0 %v1095
        %1252 = vmatprep.subr.bf16.mxu0 0
        %1253 = vmatpush1.bf16.msra.mxu0 0
        %1254 = vmatprep.subr.bf16.mxu0 0
        %1255 = vmatpush1.bf16.msra.mxu0 0
        %1256 = vmatprep.subr.bf16.mxu0 0
        %1257 = vmatpush1.bf16.msra.mxu0 0
        %1258 = vmatprep.subr.bf16.mxu0 0
        %1259 = vmatpush1.bf16.msra.mxu0 0
        %1260 = vmatprep.subr.bf16.mxu0 0
        %1261 = vmatpush1.bf16.msra.mxu0 0
        %1262 = vmatprep.subr.bf16.mxu0 0
        %1263 = vmatpush1.bf16.msra.mxu0 0
        %1264 = vmatprep.subr.bf16.mxu0 0
        %1265 = vmatpush1.bf16.msra.mxu0 0
        %1266 = vmatprep.subr.bf16.mxu0 0
        %1267 = vmatpush1.bf16.msra.mxu0 0
        %1268 = vmatprep.subr.bf16.mxu0 0
        %1269 = vmatpush1.bf16.msra.mxu0 0
        %1270 = vmatprep.subr.bf16.mxu0 0
        %1271 = vmatpush1.bf16.msra.mxu0 0
        %1272 = vmatprep.subr.bf16.mxu0 0
        %1273 = vmatpush1.bf16.msra.mxu0 0
        %1274 = vmatprep.subr.bf16.mxu0 0
        %1275 = vmatpush1.bf16.msra.mxu0 0
        %1276 = vmatprep.subr.bf16.mxu0 0
        %1277 = vmatpush1.bf16.msra.mxu0 0
        %1278 = vmatprep.subr.bf16.mxu0 0
        %1279 = vmatpush1.bf16.msra.mxu0 0
        %1280 = vmatprep.subr.bf16.mxu0 0
        %1281 = vmatpush1.bf16.msra.mxu0 0
        %1282 = vmatprep.mubr.bf16.mxu0 0
        %1283 = vmatmul.mubr.bf16.gmra.mrb[0].mxu0 %v1139
        %v1284 = vpop.f32.mrb[0].mxu0
        %v1285 = vadd.f32 %v1110, %v1284
        %v1286 = vpop.f32.mrb[0].mxu0
        %v1287 = vadd.f32 %v1110, %v1286
        %v1288 = vpop.f32.mrb[0].mxu0
        %v1289 = vadd.f32 %v1115, %v1288
        %v1290 = vpop.f32.mrb[0].mxu0
        %v1291 = vadd.f32 %v1115, %v1290
        %1292 = vmatprep.mubr.bf16.mxu0 0
        %1293 = vmatmul.mubr.bf16.gmra.mrb[0].mxu0 %v1142
        %v1294 = vpop.f32.mrb[0].mxu0
        %v1295 = vadd.f32 %v1120, %v1294
        %v1296 = vpop.f32.mrb[0].mxu0
        %v1297 = vadd.f32 %v1120, %v1296
        %v1298 = vpop.f32.mrb[0].mxu0
        %v1299 = vadd.f32 %v1125, %v1298
        %v1300 = vpop.f32.mrb[0].mxu0
        %v1301 = vadd.f32 %v1125, %v1300
        %1302 = vdwg.mxu0
        %1303 = vmatprep.subr.bf16.mxu0 %v1098
        %1304 = vmatpush1.bf16.msra.mxu0 %v1097
        %1305 = vmatprep.subr.bf16.mxu0 0
        %1306 = vmatpush1.bf16.msra.mxu0 0
        %1307 = vmatprep.subr.bf16.mxu0 0
        %1308 = vmatpush1.bf16.msra.mxu0 0
        %1309 = vmatprep.subr.bf16.mxu0 0
        %1310 = vmatpush1.bf16.msra.mxu0 0
        %1311 = vmatprep.subr.bf16.mxu0 0
        %1312 = vmatpush1.bf16.msra.mxu0 0
        %1313 = vmatprep.subr.bf16.mxu0 0
        %1314 = vmatpush1.bf16.msra.mxu0 0
        %1315 = vmatprep.subr.bf16.mxu0 0
        %1316 = vmatpush1.bf16.msra.mxu0 0
        %1317 = vmatprep.subr.bf16.mxu0 0
        %1318 = vmatpush1.bf16.msra.mxu0 0
        %1319 = vmatprep.subr.bf16.mxu0 0
        %1320 = vmatpush1.bf16.msra.mxu0 0
        %1321 = vmatprep.subr.bf16.mxu0 0
        %1322 = vmatpush1.bf16.msra.mxu0 0
        %1323 = vmatprep.subr.bf16.mxu0 0
        %1324 = vmatpush1.bf16.msra.mxu0 0
        %1325 = vmatprep.subr.bf16.mxu0 0
        %1326 = vmatpush1.bf16.msra.mxu0 0
        %1327 = vmatprep.subr.bf16.mxu0 0
        %1328 = vmatpush1.bf16.msra.mxu0 0
        %1329 = vmatprep.subr.bf16.mxu0 0
        %1330 = vmatpush1.bf16.msra.mxu0 0
        %1331 = vmatprep.subr.bf16.mxu0 0
        %1332 = vmatpush1.bf16.msra.mxu0 0
        %1333 = vmatprep.subr.bf16.mxu0 0
        %1334 = vmatpush1.bf16.msra.mxu0 0
        %1335 = vmatprep.mubr.bf16.mxu0 0
        %1336 = vmatmul.mubr.bf16.gmra.mrb[0].mxu0 %v1139
        %v1337 = vpop.f32.mrb[0].mxu0
        %v1338 = vadd.f32 %v1110, %v1337
        %v1339 = vpop.f32.mrb[0].mxu0
        %v1340 = vadd.f32 %v1110, %v1339
        %v1341 = vpop.f32.mrb[0].mxu0
        %v1342 = vadd.f32 %v1115, %v1341
        %v1343 = vpop.f32.mrb[0].mxu0
        %v1344 = vadd.f32 %v1115, %v1343
        %1345 = vmatprep.mubr.bf16.mxu0 0
        %1346 = vmatmul.mubr.bf16.gmra.mrb[0].mxu0 %v1142
        %v1347 = vpop.f32.mrb[0].mxu0
        %v1348 = vadd.f32 %v1120, %v1347
        %v1349 = vpop.f32.mrb[0].mxu0
        %v1350 = vadd.f32 %v1120, %v1349
        %v1351 = vpop.f32.mrb[0].mxu0
        %v1352 = vadd.f32 %v1125, %v1351
        %v1353 = vpop.f32.mrb[0].mxu0
        %v1354 = vadd.f32 %v1125, %v1353
        %1355 = vdwg.mxu0
        %v1356 = vadd.f32 %v1179, %v832
        %v1357 = vadd.f32 %v1181, %v833
        %v1358 = vadd.f32 %v1232, %v834
        %v1359 = vadd.f32 %v1234, %v835
        %v1360 = vadd.f32 %v1285, %v836
        %v1361 = vadd.f32 %v1287, %v837
        %v1362 = vadd.f32 %v1338, %v838
        %v1363 = vadd.f32 %v1340, %v839
        %v1364 = vadd.f32 %v1183, %v840
        %v1365 = vadd.f32 %v1185, %v841
        %v1366 = vadd.f32 %v1236, %v842
        %v1367 = vadd.f32 %v1238, %v843
        %v1368 = vadd.f32 %v1289, %v844
        %v1369 = vadd.f32 %v1291, %v845
        %v1370 = vadd.f32 %v1342, %v846
        %v1371 = vadd.f32 %v1344, %v847
        %v1372 = vadd.f32 %v1189, %v848
        %v1373 = vadd.f32 %v1191, %v849
        %v1374 = vadd.f32 %v1242, %v850
        %v1375 = vadd.f32 %v1244, %v851
        %v1376 = vadd.f32 %v1295, %v852
        %v1377 = vadd.f32 %v1297, %v853
        %v1378 = vadd.f32 %v1348, %v854
        %v1379 = vadd.f32 %v1350, %v855
        %v1380 = vadd.f32 %v1193, %v856
        %v1381 = vadd.f32 %v1195, %v857
        %v1382 = vadd.f32 %v1246, %v858
        %v1383 = vadd.f32 %v1248, %v859
        %v1384 = vadd.f32 %v1299, %v860
        %v1385 = vadd.f32 %v1301, %v861
        %v1386 = vadd.f32 %v1352, %v862
        %v1387 = vadd.f32 %v1354, %v863
        %v1388 = vmax.f32 %v1356, 0.0
        %v1389 = vmax.f32 %v1357, 0.0
        %v1390 = vmax.f32 %v1358, 0.0
        %v1391 = vmax.f32 %v1359, 0.0
        %v1392 = vmax.f32 %v1360, 0.0
        %v1393 = vmax.f32 %v1361, 0.0
        %v1394 = vmax.f32 %v1362, 0.0
        %v1395 = vmax.f32 %v1363, 0.0
        %v1396 = vmax.f32 %v1364, 0.0
        %v1397 = vmax.f32 %v1365, 0.0
        %v1398 = vmax.f32 %v1366, 0.0
        %v1399 = vmax.f32 %v1367, 0.0
        %v1400 = vmax.f32 %v1368, 0.0
        %v1401 = vmax.f32 %v1369, 0.0
        %v1402 = vmax.f32 %v1370, 0.0
        %v1403 = vmax.f32 %v1371, 0.0
        %v1404 = vmax.f32 %v1372, 0.0
        %v1405 = vmax.f32 %v1373, 0.0
        %v1406 = vmax.f32 %v1374, 0.0
        %v1407 = vmax.f32 %v1375, 0.0
        %v1408 = vmax.f32 %v1376, 0.0
        %v1409 = vmax.f32 %v1377, 0.0
        %v1410 = vmax.f32 %v1378, 0.0
        %v1411 = vmax.f32 %v1379, 0.0
        %v1412 = vmax.f32 %v1380, 0.0
        %v1413 = vmax.f32 %v1381, 0.0
        %v1414 = vmax.f32 %v1382, 0.0
        %v1415 = vmax.f32 %v1383, 0.0
        %v1416 = vmax.f32 %v1384, 0.0
        %v1417 = vmax.f32 %v1385, 0.0
        %v1418 = vmax.f32 %v1386, 0.0
        %v1419 = vmax.f32 %v1387, 0.0
        %v1420 = vpack.c.bf16 %v1396, %v1388
        %v1421 = vpack.c.bf16 %v1397, %v1389
        %v1422 = vpack.c.bf16 %v1398, %v1390
        %v1423 = vpack.c.bf16 %v1399, %v1391
        %v1424 = vpack.c.bf16 %v1400, %v1392
        %v1425 = vpack.c.bf16 %v1401, %v1393
        %v1426 = vpack.c.bf16 %v1402, %v1394
        %v1427 = vpack.c.bf16 %v1403, %v1395
        %v1428 = vpack.c.bf16 %v1412, %v1404
        %v1429 = vpack.c.bf16 %v1413, %v1405
        %v1430 = vpack.c.bf16 %v1414, %v1406
        %v1431 = vpack.c.bf16 %v1415, %v1407
        %v1432 = vpack.c.bf16 %v1416, %v1408
        %v1433 = vpack.c.bf16 %v1417, %v1409
        %v1434 = vpack.c.bf16 %v1418, %v1410
        %v1435 = vpack.c.bf16 %v1419, %v1411
        %s1436 = scalar_lea.vmem %s4, 8
        %v1437 = vld [vmem:[%s1436] sm:$0xf]
        %v1438 = vld [vmem:[%s1436 + $0x4] sm:$0xf]
        %s1439 = scalar_lea.vmem %s5, 16
        %v1440 = vld [vmem:[%s1439] sm:$0xff]
        %v1441 = vld [vmem:[%s1439 + $0x8] sm:$0xff]
        %1443 = vset.pattern.permute.xlu0 0
        %1444 = vperm.xlu0 %1443, %v1440
        %v1445 = vpop.permute.xlu0 %1444
        %1448 = vset.pattern.permute.xlu0 0
        %1449 = vperm.xlu0 %1448, %v1441
        %v1450 = vpop.permute.xlu0 %1449
        %v1454 = vunpack.c.l.b16 %v1437
        %v1455 = vunpack.c.l.b16 %v1438
        %v1456 = vpack.c.b16 %v1455, %v1454
        %v1458 = vsel %vm899, %v1456, 0
        %1460 = vmatprep.subr.bf16.mxu0 %v1421
        %1461 = vmatpush1.bf16.msra.mxu0 %v1420
        %1462 = vmatprep.subr.bf16.mxu0 %v1429
        %1463 = vmatpush1.bf16.msra.mxu0 %v1428
        %1464 = vmatprep.subr.bf16.mxu0 0
        %1465 = vmatpush1.bf16.msra.mxu0 0
        %1466 = vmatprep.subr.bf16.mxu0 0
        %1467 = vmatpush1.bf16.msra.mxu0 0
        %1468 = vmatprep.subr.bf16.mxu0 0
        %1469 = vmatpush1.bf16.msra.mxu0 0
        %1470 = vmatprep.subr.bf16.mxu0 0
        %1471 = vmatpush1.bf16.msra.mxu0 0
        %1472 = vmatprep.subr.bf16.mxu0 0
        %1473 = vmatpush1.bf16.msra.mxu0 0
        %1474 = vmatprep.subr.bf16.mxu0 0
        %1475 = vmatpush1.bf16.msra.mxu0 0
        %1476 = vmatprep.subr.bf16.mxu0 0
        %1477 = vmatpush1.bf16.msra.mxu0 0
        %1478 = vmatprep.subr.bf16.mxu0 0
        %1479 = vmatpush1.bf16.msra.mxu0 0
        %1480 = vmatprep.subr.bf16.mxu0 0
        %1481 = vmatpush1.bf16.msra.mxu0 0
        %1482 = vmatprep.subr.bf16.mxu0 0
        %1483 = vmatpush1.bf16.msra.mxu0 0
        %1484 = vmatprep.subr.bf16.mxu0 0
        %1485 = vmatpush1.bf16.msra.mxu0 0
        %1486 = vmatprep.subr.bf16.mxu0 0
        %1487 = vmatpush1.bf16.msra.mxu0 0
        %1488 = vmatprep.subr.bf16.mxu0 0
        %1489 = vmatpush1.bf16.msra.mxu0 0
        %1490 = vmatprep.subr.bf16.mxu0 0
        %1491 = vmatpush1.bf16.msra.mxu0 0
        %1492 = vmatprep.mubr.bf16.mxu0 0
        %1493 = vmatmul.mubr.bf16.gmra.mrb[0].mxu0 %v1458
        %v1494 = vpop.f32.mrb[0].mxu0
        %v1495 = vadd.f32 %v1445, %v1494
        %v1496 = vpop.f32.mrb[0].mxu0
        %v1497 = vadd.f32 %v1445, %v1496
        %v1498 = vpop.f32.mrb[0].mxu0
        %v1499 = vadd.f32 %v1450, %v1498
        %v1500 = vpop.f32.mrb[0].mxu0
        %v1501 = vadd.f32 %v1450, %v1500
        %1502 = vdwg.mxu0
        %1503 = vmatprep.subr.bf16.mxu0 %v1423
        %1504 = vmatpush1.bf16.msra.mxu0 %v1422
        %1505 = vmatprep.subr.bf16.mxu0 %v1431
        %1506 = vmatpush1.bf16.msra.mxu0 %v1430
        %1507 = vmatprep.subr.bf16.mxu0 0
        %1508 = vmatpush1.bf16.msra.mxu0 0
        %1509 = vmatprep.subr.bf16.mxu0 0
        %1510 = vmatpush1.bf16.msra.mxu0 0
        %1511 = vmatprep.subr.bf16.mxu0 0
        %1512 = vmatpush1.bf16.msra.mxu0 0
        %1513 = vmatprep.subr.bf16.mxu0 0
        %1514 = vmatpush1.bf16.msra.mxu0 0
        %1515 = vmatprep.subr.bf16.mxu0 0
        %1516 = vmatpush1.bf16.msra.mxu0 0
        %1517 = vmatprep.subr.bf16.mxu0 0
        %1518 = vmatpush1.bf16.msra.mxu0 0
        %1519 = vmatprep.subr.bf16.mxu0 0
        %1520 = vmatpush1.bf16.msra.mxu0 0
        %1521 = vmatprep.subr.bf16.mxu0 0
        %1522 = vmatpush1.bf16.msra.mxu0 0
        %1523 = vmatprep.subr.bf16.mxu0 0
        %1524 = vmatpush1.bf16.msra.mxu0 0
        %1525 = vmatprep.subr.bf16.mxu0 0
        %1526 = vmatpush1.bf16.msra.mxu0 0
        %1527 = vmatprep.subr.bf16.mxu0 0
        %1528 = vmatpush1.bf16.msra.mxu0 0
        %1529 = vmatprep.subr.bf16.mxu0 0
        %1530 = vmatpush1.bf16.msra.mxu0 0
        %1531 = vmatprep.subr.bf16.mxu0 0
        %1532 = vmatpush1.bf16.msra.mxu0 0
        %1533 = vmatprep.subr.bf16.mxu0 0
        %1534 = vmatpush1.bf16.msra.mxu0 0
        %1535 = vmatprep.mubr.bf16.mxu0 0
        %1536 = vmatmul.mubr.bf16.gmra.mrb[0].mxu0 %v1458
        %v1537 = vpop.f32.mrb[0].mxu0
        %v1538 = vadd.f32 %v1445, %v1537
        %v1539 = vpop.f32.mrb[0].mxu0
        %v1540 = vadd.f32 %v1445, %v1539
        %v1541 = vpop.f32.mrb[0].mxu0
        %v1542 = vadd.f32 %v1450, %v1541
        %v1543 = vpop.f32.mrb[0].mxu0
        %v1544 = vadd.f32 %v1450, %v1543
        %1545 = vdwg.mxu0
        %1546 = vmatprep.subr.bf16.mxu0 %v1425
        %1547 = vmatpush1.bf16.msra.mxu0 %v1424
        %1548 = vmatprep.subr.bf16.mxu0 %v1433
        %1549 = vmatpush1.bf16.msra.mxu0 %v1432
        %1550 = vmatprep.subr.bf16.mxu0 0
        %1551 = vmatpush1.bf16.msra.mxu0 0
        %1552 = vmatprep.subr.bf16.mxu0 0
        %1553 = vmatpush1.bf16.msra.mxu0 0
        %1554 = vmatprep.subr.bf16.mxu0 0
        %1555 = vmatpush1.bf16.msra.mxu0 0
        %1556 = vmatprep.subr.bf16.mxu0 0
        %1557 = vmatpush1.bf16.msra.mxu0 0
        %1558 = vmatprep.subr.bf16.mxu0 0
        %1559 = vmatpush1.bf16.msra.mxu0 0
        %1560 = vmatprep.subr.bf16.mxu0 0
        %1561 = vmatpush1.bf16.msra.mxu0 0
        %1562 = vmatprep.subr.bf16.mxu0 0
        %1563 = vmatpush1.bf16.msra.mxu0 0
        %1564 = vmatprep.subr.bf16.mxu0 0
        %1565 = vmatpush1.bf16.msra.mxu0 0
        %1566 = vmatprep.subr.bf16.mxu0 0
        %1567 = vmatpush1.bf16.msra.mxu0 0
        %1568 = vmatprep.subr.bf16.mxu0 0
        %1569 = vmatpush1.bf16.msra.mxu0 0
        %1570 = vmatprep.subr.bf16.mxu0 0
        %1571 = vmatpush1.bf16.msra.mxu0 0
        %1572 = vmatprep.subr.bf16.mxu0 0
        %1573 = vmatpush1.bf16.msra.mxu0 0
        %1574 = vmatprep.subr.bf16.mxu0 0
        %1575 = vmatpush1.bf16.msra.mxu0 0
        %1576 = vmatprep.subr.bf16.mxu0 0
        %1577 = vmatpush1.bf16.msra.mxu0 0
        %1578 = vmatprep.mubr.bf16.mxu0 0
        %1579 = vmatmul.mubr.bf16.gmra.mrb[0].mxu0 %v1458
        %v1580 = vpop.f32.mrb[0].mxu0
        %v1581 = vadd.f32 %v1445, %v1580
        %v1582 = vpop.f32.mrb[0].mxu0
        %v1583 = vadd.f32 %v1445, %v1582
        %v1584 = vpop.f32.mrb[0].mxu0
        %v1585 = vadd.f32 %v1450, %v1584
        %v1586 = vpop.f32.mrb[0].mxu0
        %v1587 = vadd.f32 %v1450, %v1586
        %1588 = vdwg.mxu0
        %1589 = vmatprep.subr.bf16.mxu0 %v1427
        %1590 = vmatpush1.bf16.msra.mxu0 %v1426
        %1591 = vmatprep.subr.bf16.mxu0 %v1435
        %1592 = vmatpush1.bf16.msra.mxu0 %v1434
        %1593 = vmatprep.subr.bf16.mxu0 0
        %1594 = vmatpush1.bf16.msra.mxu0 0
        %1595 = vmatprep.subr.bf16.mxu0 0
        %1596 = vmatpush1.bf16.msra.mxu0 0
        %1597 = vmatprep.subr.bf16.mxu0 0
        %1598 = vmatpush1.bf16.msra.mxu0 0
        %1599 = vmatprep.subr.bf16.mxu0 0
        %1600 = vmatpush1.bf16.msra.mxu0 0
        %1601 = vmatprep.subr.bf16.mxu0 0
        %1602 = vmatpush1.bf16.msra.mxu0 0
        %1603 = vmatprep.subr.bf16.mxu0 0
        %1604 = vmatpush1.bf16.msra.mxu0 0
        %1605 = vmatprep.subr.bf16.mxu0 0
        %1606 = vmatpush1.bf16.msra.mxu0 0
        %1607 = vmatprep.subr.bf16.mxu0 0
        %1608 = vmatpush1.bf16.msra.mxu0 0
        %1609 = vmatprep.subr.bf16.mxu0 0
        %1610 = vmatpush1.bf16.msra.mxu0 0
        %1611 = vmatprep.subr.bf16.mxu0 0
        %1612 = vmatpush1.bf16.msra.mxu0 0
        %1613 = vmatprep.subr.bf16.mxu0 0
        %1614 = vmatpush1.bf16.msra.mxu0 0
        %1615 = vmatprep.subr.bf16.mxu0 0
        %1616 = vmatpush1.bf16.msra.mxu0 0
        %1617 = vmatprep.subr.bf16.mxu0 0
        %1618 = vmatpush1.bf16.msra.mxu0 0
        %1619 = vmatprep.subr.bf16.mxu0 0
        %1620 = vmatpush1.bf16.msra.mxu0 0
        %1621 = vmatprep.mubr.bf16.mxu0 0
        %1622 = vmatmul.mubr.bf16.gmra.mrb[0].mxu0 %v1458
        %v1623 = vpop.f32.mrb[0].mxu0
        %v1624 = vadd.f32 %v1445, %v1623
        %v1625 = vpop.f32.mrb[0].mxu0
        %v1626 = vadd.f32 %v1445, %v1625
        %v1627 = vpop.f32.mrb[0].mxu0
        %v1628 = vadd.f32 %v1450, %v1627
        %v1629 = vpop.f32.mrb[0].mxu0
        %v1630 = vadd.f32 %v1450, %v1629
        %1631 = vdwg.mxu0
        %v1632 = vmax.f32 %v1495, 0.0
        %v1633 = vmax.f32 %v1497, 0.0
        %v1634 = vmax.f32 %v1538, 0.0
        %v1635 = vmax.f32 %v1540, 0.0
        %v1636 = vmax.f32 %v1581, 0.0
        %v1637 = vmax.f32 %v1583, 0.0
        %v1638 = vmax.f32 %v1624, 0.0
        %v1639 = vmax.f32 %v1626, 0.0
        %v1640 = vmax.f32 %v1499, 0.0
        %v1641 = vmax.f32 %v1501, 0.0
        %v1642 = vmax.f32 %v1542, 0.0
        %v1643 = vmax.f32 %v1544, 0.0
        %v1644 = vmax.f32 %v1585, 0.0
        %v1645 = vmax.f32 %v1587, 0.0
        %v1646 = vmax.f32 %v1628, 0.0
        %v1647 = vmax.f32 %v1630, 0.0
        %v1648 = vpack.c.bf16 %v1640, %v1632
        %v1649 = vpack.c.bf16 %v1641, %v1633
        %v1650 = vpack.c.bf16 %v1642, %v1634
        %v1651 = vpack.c.bf16 %v1643, %v1635
        %v1652 = vpack.c.bf16 %v1644, %v1636
        %v1653 = vpack.c.bf16 %v1645, %v1637
        %v1654 = vpack.c.bf16 %v1646, %v1638
        %v1655 = vpack.c.bf16 %v1647, %v1639
        %s1656 = scalar_lea.vmem %s6, 16
        %v1657 = vld [vmem:[%s1656] sm:$0xf]
        %v1658 = vld [vmem:[%s1656 + $0x4] sm:$0xf]
        %v1659 = vld [vmem:[%s1656 + $0x8] sm:$0xf]
        %v1660 = vld [vmem:[%s1656 + $0xc] sm:$0xf]
        %s1661 = scalar_lea.vmem %s7, 32
        %v1662 = vld [vmem:[%s1661] sm:$0xff]
        %v1663 = vld [vmem:[%s1661 + $0x8] sm:$0xff]
        %v1664 = vld [vmem:[%s1661 + $0x10] sm:$0xff]
        %v1665 = vld [vmem:[%s1661 + $0x18] sm:$0xff]
        %1667 = vset.pattern.permute.xlu0 0
        %1668 = vperm.xlu0 %1667, %v1662
        %v1669 = vpop.permute.xlu0 %1668
        %1672 = vset.pattern.permute.xlu0 0
        %1673 = vperm.xlu0 %1672, %v1663
        %v1674 = vpop.permute.xlu0 %1673
        %1677 = vset.pattern.permute.xlu0 0
        %1678 = vperm.xlu0 %1677, %v1664
        %v1679 = vpop.permute.xlu0 %1678
        %1682 = vset.pattern.permute.xlu0 0
        %1683 = vperm.xlu0 %1682, %v1665
        %v1684 = vpop.permute.xlu0 %1683
        %v1690 = vunpack.c.l.b16 %v1657
        %v1691 = vunpack.c.l.b16 %v1658
        %v1692 = vunpack.c.l.b16 %v1659
        %v1693 = vunpack.c.l.b16 %v1660
        %v1694 = vpack.c.b16 %v1691, %v1690
        %v1695 = vpack.c.b16 %v1693, %v1692
        %v1697 = vsel %vm1137, %v1694, 0
        %v1700 = vsel %vm1137, %v1695, 0
        %1702 = vmatprep.subr.bf16.mxu0 %v1649
        %1703 = vmatpush1.bf16.msra.mxu0 %v1648
        %1704 = vmatprep.subr.bf16.mxu0 0
        %1705 = vmatpush1.bf16.msra.mxu0 0
        %1706 = vmatprep.subr.bf16.mxu0 0
        %1707 = vmatpush1.bf16.msra.mxu0 0
        %1708 = vmatprep.subr.bf16.mxu0 0
        %1709 = vmatpush1.bf16.msra.mxu0 0
        %1710 = vmatprep.subr.bf16.mxu0 0
        %1711 = vmatpush1.bf16.msra.mxu0 0
        %1712 = vmatprep.subr.bf16.mxu0 0
        %1713 = vmatpush1.bf16.msra.mxu0 0
        %1714 = vmatprep.subr.bf16.mxu0 0
        %1715 = vmatpush1.bf16.msra.mxu0 0
        %1716 = vmatprep.subr.bf16.mxu0 0
        %1717 = vmatpush1.bf16.msra.mxu0 0
        %1718 = vmatprep.subr.bf16.mxu0 0
        %1719 = vmatpush1.bf16.msra.mxu0 0
        %1720 = vmatprep.subr.bf16.mxu0 0
        %1721 = vmatpush1.bf16.msra.mxu0 0
        %1722 = vmatprep.subr.bf16.mxu0 0
        %1723 = vmatpush1.bf16.msra.mxu0 0
        %1724 = vmatprep.subr.bf16.mxu0 0
        %1725 = vmatpush1.bf16.msra.mxu0 0
        %1726 = vmatprep.subr.bf16.mxu0 0
        %1727 = vmatpush1.bf16.msra.mxu0 0
        %1728 = vmatprep.subr.bf16.mxu0 0
        %1729 = vmatpush1.bf16.msra.mxu0 0
        %1730 = vmatprep.subr.bf16.mxu0 0
        %1731 = vmatpush1.bf16.msra.mxu0 0
        %1732 = vmatprep.subr.bf16.mxu0 0
        %1733 = vmatpush1.bf16.msra.mxu0 0
        %1734 = vmatprep.mubr.bf16.mxu0 0
        %1735 = vmatmul.mubr.bf16.gmra.mrb[0].mxu0 %v1697
        %v1736 = vpop.f32.mrb[0].mxu0
        %v1737 = vadd.f32 %v1669, %v1736
        %v1738 = vpop.f32.mrb[0].mxu0
        %v1739 = vadd.f32 %v1669, %v1738
        %v1740 = vpop.f32.mrb[0].mxu0
        %v1741 = vadd.f32 %v1674, %v1740
        %v1742 = vpop.f32.mrb[0].mxu0
        %v1743 = vadd.f32 %v1674, %v1742
        %1744 = vmatprep.mubr.bf16.mxu0 0
        %1745 = vmatmul.mubr.bf16.gmra.mrb[0].mxu0 %v1700
        %v1746 = vpop.f32.mrb[0].mxu0
        %v1747 = vadd.f32 %v1679, %v1746
        %v1748 = vpop.f32.mrb[0].mxu0
        %v1749 = vadd.f32 %v1679, %v1748
        %v1750 = vpop.f32.mrb[0].mxu0
        %v1751 = vadd.f32 %v1684, %v1750
        %v1752 = vpop.f32.mrb[0].mxu0
        %v1753 = vadd.f32 %v1684, %v1752
        %1754 = vdwg.mxu0
        %1755 = vmatprep.subr.bf16.mxu0 %v1651
        %1756 = vmatpush1.bf16.msra.mxu0 %v1650
        %1757 = vmatprep.subr.bf16.mxu0 0
        %1758 = vmatpush1.bf16.msra.mxu0 0
        %1759 = vmatprep.subr.bf16.mxu0 0
        %1760 = vmatpush1.bf16.msra.mxu0 0
        %1761 = vmatprep.subr.bf16.mxu0 0
        %1762 = vmatpush1.bf16.msra.mxu0 0
        %1763 = vmatprep.subr.bf16.mxu0 0
        %1764 = vmatpush1.bf16.msra.mxu0 0
        %1765 = vmatprep.subr.bf16.mxu0 0
        %1766 = vmatpush1.bf16.msra.mxu0 0
        %1767 = vmatprep.subr.bf16.mxu0 0
        %1768 = vmatpush1.bf16.msra.mxu0 0
        %1769 = vmatprep.subr.bf16.mxu0 0
        %1770 = vmatpush1.bf16.msra.mxu0 0
        %1771 = vmatprep.subr.bf16.mxu0 0
        %1772 = vmatpush1.bf16.msra.mxu0 0
        %1773 = vmatprep.subr.bf16.mxu0 0
        %1774 = vmatpush1.bf16.msra.mxu0 0
        %1775 = vmatprep.subr.bf16.mxu0 0
        %1776 = vmatpush1.bf16.msra.mxu0 0
        %1777 = vmatprep.subr.bf16.mxu0 0
        %1778 = vmatpush1.bf16.msra.mxu0 0
        %1779 = vmatprep.subr.bf16.mxu0 0
        %1780 = vmatpush1.bf16.msra.mxu0 0
        %1781 = vmatprep.subr.bf16.mxu0 0
        %1782 = vmatpush1.bf16.msra.mxu0 0
        %1783 = vmatprep.subr.bf16.mxu0 0
        %1784 = vmatpush1.bf16.msra.mxu0 0
        %1785 = vmatprep.subr.bf16.mxu0 0
        %1786 = vmatpush1.bf16.msra.mxu0 0
        %1787 = vmatprep.mubr.bf16.mxu0 0
        %1788 = vmatmul.mubr.bf16.gmra.mrb[0].mxu0 %v1697
        %v1789 = vpop.f32.mrb[0].mxu0
        %v1790 = vadd.f32 %v1669, %v1789
        %v1791 = vpop.f32.mrb[0].mxu0
        %v1792 = vadd.f32 %v1669, %v1791
        %v1793 = vpop.f32.mrb[0].mxu0
        %v1794 = vadd.f32 %v1674, %v1793
        %v1795 = vpop.f32.mrb[0].mxu0
        %v1796 = vadd.f32 %v1674, %v1795
        %1797 = vmatprep.mubr.bf16.mxu0 0
        %1798 = vmatmul.mubr.bf16.gmra.mrb[0].mxu0 %v1700
        %v1799 = vpop.f32.mrb[0].mxu0
        %v1800 = vadd.f32 %v1679, %v1799
        %v1801 = vpop.f32.mrb[0].mxu0
        %v1802 = vadd.f32 %v1679, %v1801
        %v1803 = vpop.f32.mrb[0].mxu0
        %v1804 = vadd.f32 %v1684, %v1803
        %v1805 = vpop.f32.mrb[0].mxu0
        %v1806 = vadd.f32 %v1684, %v1805
        %1807 = vdwg.mxu0
        %1808 = vmatprep.subr.bf16.mxu0 %v1653
        %1809 = vmatpush1.bf16.msra.mxu0 %v1652
        %1810 = vmatprep.subr.bf16.mxu0 0
        %1811 = vmatpush1.bf16.msra.mxu0 0
        %1812 = vmatprep.subr.bf16.mxu0 0
        %1813 = vmatpush1.bf16.msra.mxu0 0
        %1814 = vmatprep.subr.bf16.mxu0 0
        %1815 = vmatpush1.bf16.msra.mxu0 0
        %1816 = vmatprep.subr.bf16.mxu0 0
        %1817 = vmatpush1.bf16.msra.mxu0 0
        %1818 = vmatprep.subr.bf16.mxu0 0
        %1819 = vmatpush1.bf16.msra.mxu0 0
        %1820 = vmatprep.subr.bf16.mxu0 0
        %1821 = vmatpush1.bf16.msra.mxu0 0
        %1822 = vmatprep.subr.bf16.mxu0 0
        %1823 = vmatpush1.bf16.msra.mxu0 0
        %1824 = vmatprep.subr.bf16.mxu0 0
        %1825 = vmatpush1.bf16.msra.mxu0 0
        %1826 = vmatprep.subr.bf16.mxu0 0
        %1827 = vmatpush1.bf16.msra.mxu0 0
        %1828 = vmatprep.subr.bf16.mxu0 0
        %1829 = vmatpush1.bf16.msra.mxu0 0
        %1830 = vmatprep.subr.bf16.mxu0 0
        %1831 = vmatpush1.bf16.msra.mxu0 0
        %1832 = vmatprep.subr.bf16.mxu0 0
        %1833 = vmatpush1.bf16.msra.mxu0 0
        %1834 = vmatprep.subr.bf16.mxu0 0
        %1835 = vmatpush1.bf16.msra.mxu0 0
        %1836 = vmatprep.subr.bf16.mxu0 0
        %1837 = vmatpush1.bf16.msra.mxu0 0
        %1838 = vmatprep.subr.bf16.mxu0 0
        %1839 = vmatpush1.bf16.msra.mxu0 0
        %1840 = vmatprep.mubr.bf16.mxu0 0
        %1841 = vmatmul.mubr.bf16.gmra.mrb[0].mxu0 %v1697
        %v1842 = vpop.f32.mrb[0].mxu0
        %v1843 = vadd.f32 %v1669, %v1842
        %v1844 = vpop.f32.mrb[0].mxu0
        %v1845 = vadd.f32 %v1669, %v1844
        %v1846 = vpop.f32.mrb[0].mxu0
        %v1847 = vadd.f32 %v1674, %v1846
        %v1848 = vpop.f32.mrb[0].mxu0
        %v1849 = vadd.f32 %v1674, %v1848
        %1850 = vmatprep.mubr.bf16.mxu0 0
        %1851 = vmatmul.mubr.bf16.gmra.mrb[0].mxu0 %v1700
        %v1852 = vpop.f32.mrb[0].mxu0
        %v1853 = vadd.f32 %v1679, %v1852
        %v1854 = vpop.f32.mrb[0].mxu0
        %v1855 = vadd.f32 %v1679, %v1854
        %v1856 = vpop.f32.mrb[0].mxu0
        %v1857 = vadd.f32 %v1684, %v1856
        %v1858 = vpop.f32.mrb[0].mxu0
        %v1859 = vadd.f32 %v1684, %v1858
        %1860 = vdwg.mxu0
        %1861 = vmatprep.subr.bf16.mxu0 %v1655
        %1862 = vmatpush1.bf16.msra.mxu0 %v1654
        %1863 = vmatprep.subr.bf16.mxu0 0
        %1864 = vmatpush1.bf16.msra.mxu0 0
        %1865 = vmatprep.subr.bf16.mxu0 0
        %1866 = vmatpush1.bf16.msra.mxu0 0
        %1867 = vmatprep.subr.bf16.mxu0 0
        %1868 = vmatpush1.bf16.msra.mxu0 0
        %1869 = vmatprep.subr.bf16.mxu0 0
        %1870 = vmatpush1.bf16.msra.mxu0 0
        %1871 = vmatprep.subr.bf16.mxu0 0
        %1872 = vmatpush1.bf16.msra.mxu0 0
        %1873 = vmatprep.subr.bf16.mxu0 0
        %1874 = vmatpush1.bf16.msra.mxu0 0
        %1875 = vmatprep.subr.bf16.mxu0 0
        %1876 = vmatpush1.bf16.msra.mxu0 0
        %1877 = vmatprep.subr.bf16.mxu0 0
        %1878 = vmatpush1.bf16.msra.mxu0 0
        %1879 = vmatprep.subr.bf16.mxu0 0
        %1880 = vmatpush1.bf16.msra.mxu0 0
        %1881 = vmatprep.subr.bf16.mxu0 0
        %1882 = vmatpush1.bf16.msra.mxu0 0
        %1883 = vmatprep.subr.bf16.mxu0 0
        %1884 = vmatpush1.bf16.msra.mxu0 0
        %1885 = vmatprep.subr.bf16.mxu0 0
        %1886 = vmatpush1.bf16.msra.mxu0 0
        %1887 = vmatprep.subr.bf16.mxu0 0
        %1888 = vmatpush1.bf16.msra.mxu0 0
        %1889 = vmatprep.subr.bf16.mxu0 0
        %1890 = vmatpush1.bf16.msra.mxu0 0
        %1891 = vmatprep.subr.bf16.mxu0 0
        %1892 = vmatpush1.bf16.msra.mxu0 0
        %1893 = vmatprep.mubr.bf16.mxu0 0
        %1894 = vmatmul.mubr.bf16.gmra.mrb[0].mxu0 %v1697
        %v1895 = vpop.f32.mrb[0].mxu0
        %v1896 = vadd.f32 %v1669, %v1895
        %v1897 = vpop.f32.mrb[0].mxu0
        %v1898 = vadd.f32 %v1669, %v1897
        %v1899 = vpop.f32.mrb[0].mxu0
        %v1900 = vadd.f32 %v1674, %v1899
        %v1901 = vpop.f32.mrb[0].mxu0
        %v1902 = vadd.f32 %v1674, %v1901
        %1903 = vmatprep.mubr.bf16.mxu0 0
        %1904 = vmatmul.mubr.bf16.gmra.mrb[0].mxu0 %v1700
        %v1905 = vpop.f32.mrb[0].mxu0
        %v1906 = vadd.f32 %v1679, %v1905
        %v1907 = vpop.f32.mrb[0].mxu0
        %v1908 = vadd.f32 %v1679, %v1907
        %v1909 = vpop.f32.mrb[0].mxu0
        %v1910 = vadd.f32 %v1684, %v1909
        %v1911 = vpop.f32.mrb[0].mxu0
        %v1912 = vadd.f32 %v1684, %v1911
        %1913 = vdwg.mxu0
        %v1914 = vadd.f32 %v1737, %v1388
        %v1915 = vadd.f32 %v1739, %v1389
        %v1916 = vadd.f32 %v1790, %v1390
        %v1917 = vadd.f32 %v1792, %v1391
        %v1918 = vadd.f32 %v1843, %v1392
        %v1919 = vadd.f32 %v1845, %v1393
        %v1920 = vadd.f32 %v1896, %v1394
        %v1921 = vadd.f32 %v1898, %v1395
        %v1922 = vadd.f32 %v1741, %v1396
        %v1923 = vadd.f32 %v1743, %v1397
        %v1924 = vadd.f32 %v1794, %v1398
        %v1925 = vadd.f32 %v1796, %v1399
        %v1926 = vadd.f32 %v1847, %v1400
        %v1927 = vadd.f32 %v1849, %v1401
        %v1928 = vadd.f32 %v1900, %v1402
        %v1929 = vadd.f32 %v1902, %v1403
        %v1930 = vadd.f32 %v1747, %v1404
        %v1931 = vadd.f32 %v1749, %v1405
        %v1932 = vadd.f32 %v1800, %v1406
        %v1933 = vadd.f32 %v1802, %v1407
        %v1934 = vadd.f32 %v1853, %v1408
        %v1935 = vadd.f32 %v1855, %v1409
        %v1936 = vadd.f32 %v1906, %v1410
        %v1937 = vadd.f32 %v1908, %v1411
        %v1938 = vadd.f32 %v1751, %v1412
        %v1939 = vadd.f32 %v1753, %v1413
        %v1940 = vadd.f32 %v1804, %v1414
        %v1941 = vadd.f32 %v1806, %v1415
        %v1942 = vadd.f32 %v1857, %v1416
        %v1943 = vadd.f32 %v1859, %v1417
        %v1944 = vadd.f32 %v1910, %v1418
        %v1945 = vadd.f32 %v1912, %v1419
        %v1946 = vmax.f32 %v1914, 0.0
        %v1947 = vmax.f32 %v1915, 0.0
        %v1948 = vmax.f32 %v1916, 0.0
        %v1949 = vmax.f32 %v1917, 0.0
        %v1950 = vmax.f32 %v1918, 0.0
        %v1951 = vmax.f32 %v1919, 0.0
        %v1952 = vmax.f32 %v1920, 0.0
        %v1953 = vmax.f32 %v1921, 0.0
        %v1954 = vmax.f32 %v1922, 0.0
        %v1955 = vmax.f32 %v1923, 0.0
        %v1956 = vmax.f32 %v1924, 0.0
        %v1957 = vmax.f32 %v1925, 0.0
        %v1958 = vmax.f32 %v1926, 0.0
        %v1959 = vmax.f32 %v1927, 0.0
        %v1960 = vmax.f32 %v1928, 0.0
        %v1961 = vmax.f32 %v1929, 0.0
        %v1962 = vmax.f32 %v1930, 0.0
        %v1963 = vmax.f32 %v1931, 0.0
        %v1964 = vmax.f32 %v1932, 0.0
        %v1965 = vmax.f32 %v1933, 0.0
        %v1966 = vmax.f32 %v1934, 0.0
        %v1967 = vmax.f32 %v1935, 0.0
        %v1968 = vmax.f32 %v1936, 0.0
        %v1969 = vmax.f32 %v1937, 0.0
        %v1970 = vmax.f32 %v1938, 0.0
        %v1971 = vmax.f32 %v1939, 0.0
        %v1972 = vmax.f32 %v1940, 0.0
        %v1973 = vmax.f32 %v1941, 0.0
        %v1974 = vmax.f32 %v1942, 0.0
        %v1975 = vmax.f32 %v1943, 0.0
        %v1976 = vmax.f32 %v1944, 0.0
        %v1977 = vmax.f32 %v1945, 0.0
        %v1978 = vpack.c.bf16 %v1954, %v1946
        %v1979 = vpack.c.bf16 %v1955, %v1947
        %v1980 = vpack.c.bf16 %v1956, %v1948
        %v1981 = vpack.c.bf16 %v1957, %v1949
        %v1982 = vpack.c.bf16 %v1958, %v1950
        %v1983 = vpack.c.bf16 %v1959, %v1951
        %v1984 = vpack.c.bf16 %v1960, %v1952
        %v1985 = vpack.c.bf16 %v1961, %v1953
        %v1986 = vpack.c.bf16 %v1970, %v1962
        %v1987 = vpack.c.bf16 %v1971, %v1963
        %v1988 = vpack.c.bf16 %v1972, %v1964
        %v1989 = vpack.c.bf16 %v1973, %v1965
        %v1990 = vpack.c.bf16 %v1974, %v1966
        %v1991 = vpack.c.bf16 %v1975, %v1967
        %v1992 = vpack.c.bf16 %v1976, %v1968
        %v1993 = vpack.c.bf16 %v1977, %v1969
        %v1994 = vld [vmem:[%s8] sm:$0xf]
        %v1995 = vld [vmem:[%s8 + $0x4] sm:$0xf]
        %v1996 = vld [vmem:[%s9] sm:$0xff]
        %v1997 = vld [vmem:[%s9 + $0x8] sm:$0xff]
        %1999 = vset.pattern.permute.xlu0 0
        %2000 = vperm.xlu0 %1999, %v1996
        %v2001 = vpop.permute.xlu0 %2000
        %2004 = vset.pattern.permute.xlu0 0
        %2005 = vperm.xlu0 %2004, %v1997
        %v2006 = vpop.permute.xlu0 %2005
        %v2010 = vunpack.c.l.b16 %v1994
        %v2011 = vunpack.c.l.b16 %v1995
        %v2012 = vpack.c.b16 %v2011, %v2010
        %v2014 = vsel %vm899, %v2012, 0
        %2016 = vmatprep.subr.bf16.mxu0 %v1979
        %2017 = vmatpush1.bf16.msra.mxu0 %v1978
        %2018 = vmatprep.subr.bf16.mxu0 %v1987
        %2019 = vmatpush1.bf16.msra.mxu0 %v1986
        %2020 = vmatprep.subr.bf16.mxu0 0
        %2021 = vmatpush1.bf16.msra.mxu0 0
        %2022 = vmatprep.subr.bf16.mxu0 0
        %2023 = vmatpush1.bf16.msra.mxu0 0
        %2024 = vmatprep.subr.bf16.mxu0 0
        %2025 = vmatpush1.bf16.msra.mxu0 0
        %2026 = vmatprep.subr.bf16.mxu0 0
        %2027 = vmatpush1.bf16.msra.mxu0 0
        %2028 = vmatprep.subr.bf16.mxu0 0
        %2029 = vmatpush1.bf16.msra.mxu0 0
        %2030 = vmatprep.subr.bf16.mxu0 0
        %2031 = vmatpush1.bf16.msra.mxu0 0
        %2032 = vmatprep.subr.bf16.mxu0 0
        %2033 = vmatpush1.bf16.msra.mxu0 0
        %2034 = vmatprep.subr.bf16.mxu0 0
        %2035 = vmatpush1.bf16.msra.mxu0 0
        %2036 = vmatprep.subr.bf16.mxu0 0
        %2037 = vmatpush1.bf16.msra.mxu0 0
        %2038 = vmatprep.subr.bf16.mxu0 0
        %2039 = vmatpush1.bf16.msra.mxu0 0
        %2040 = vmatprep.subr.bf16.mxu0 0
        %2041 = vmatpush1.bf16.msra.mxu0 0
        %2042 = vmatprep.subr.bf16.mxu0 0
        %2043 = vmatpush1.bf16.msra.mxu0 0
        %2044 = vmatprep.subr.bf16.mxu0 0
        %2045 = vmatpush1.bf16.msra.mxu0 0
        %2046 = vmatprep.subr.bf16.mxu0 0
        %2047 = vmatpush1.bf16.msra.mxu0 0
        %2048 = vmatprep.mubr.bf16.mxu0 0
        %2049 = vmatmul.mubr.bf16.gmra.mrb[0].mxu0 %v2014
        %v2050 = vpop.f32.mrb[0].mxu0
        %v2051 = vadd.f32 %v2001, %v2050
        %v2052 = vpop.f32.mrb[0].mxu0
        %v2053 = vadd.f32 %v2001, %v2052
        %v2054 = vpop.f32.mrb[0].mxu0
        %v2055 = vadd.f32 %v2006, %v2054
        %v2056 = vpop.f32.mrb[0].mxu0
        %v2057 = vadd.f32 %v2006, %v2056
        %2058 = vdwg.mxu0
        %2059 = vmatprep.subr.bf16.mxu0 %v1981
        %2060 = vmatpush1.bf16.msra.mxu0 %v1980
        %2061 = vmatprep.subr.bf16.mxu0 %v1989
        %2062 = vmatpush1.bf16.msra.mxu0 %v1988
        %2063 = vmatprep.subr.bf16.mxu0 0
        %2064 = vmatpush1.bf16.msra.mxu0 0
        %2065 = vmatprep.subr.bf16.mxu0 0
        %2066 = vmatpush1.bf16.msra.mxu0 0
        %2067 = vmatprep.subr.bf16.mxu0 0
        %2068 = vmatpush1.bf16.msra.mxu0 0
        %2069 = vmatprep.subr.bf16.mxu0 0
        %2070 = vmatpush1.bf16.msra.mxu0 0
        %2071 = vmatprep.subr.bf16.mxu0 0
        %2072 = vmatpush1.bf16.msra.mxu0 0
        %2073 = vmatprep.subr.bf16.mxu0 0
        %2074 = vmatpush1.bf16.msra.mxu0 0
        %2075 = vmatprep.subr.bf16.mxu0 0
        %2076 = vmatpush1.bf16.msra.mxu0 0
        %2077 = vmatprep.subr.bf16.mxu0 0
        %2078 = vmatpush1.bf16.msra.mxu0 0
        %2079 = vmatprep.subr.bf16.mxu0 0
        %2080 = vmatpush1.bf16.msra.mxu0 0
        %2081 = vmatprep.subr.bf16.mxu0 0
        %2082 = vmatpush1.bf16.msra.mxu0 0
        %2083 = vmatprep.subr.bf16.mxu0 0
        %2084 = vmatpush1.bf16.msra.mxu0 0
        %2085 = vmatprep.subr.bf16.mxu0 0
        %2086 = vmatpush1.bf16.msra.mxu0 0
        %2087 = vmatprep.subr.bf16.mxu0 0
        %2088 = vmatpush1.bf16.msra.mxu0 0
        %2089 = vmatprep.subr.bf16.mxu0 0
        %2090 = vmatpush1.bf16.msra.mxu0 0
        %2091 = vmatprep.mubr.bf16.mxu0 0
        %2092 = vmatmul.mubr.bf16.gmra.mrb[0].mxu0 %v2014
        %v2093 = vpop.f32.mrb[0].mxu0
        %v2094 = vadd.f32 %v2001, %v2093
        %v2095 = vpop.f32.mrb[0].mxu0
        %v2096 = vadd.f32 %v2001, %v2095
        %v2097 = vpop.f32.mrb[0].mxu0
        %v2098 = vadd.f32 %v2006, %v2097
        %v2099 = vpop.f32.mrb[0].mxu0
        %v2100 = vadd.f32 %v2006, %v2099
        %2101 = vdwg.mxu0
        %2102 = vmatprep.subr.bf16.mxu0 %v1983
        %2103 = vmatpush1.bf16.msra.mxu0 %v1982
        %2104 = vmatprep.subr.bf16.mxu0 %v1991
        %2105 = vmatpush1.bf16.msra.mxu0 %v1990
        %2106 = vmatprep.subr.bf16.mxu0 0
        %2107 = vmatpush1.bf16.msra.mxu0 0
        %2108 = vmatprep.subr.bf16.mxu0 0
        %2109 = vmatpush1.bf16.msra.mxu0 0
        %2110 = vmatprep.subr.bf16.mxu0 0
        %2111 = vmatpush1.bf16.msra.mxu0 0
        %2112 = vmatprep.subr.bf16.mxu0 0
        %2113 = vmatpush1.bf16.msra.mxu0 0
        %2114 = vmatprep.subr.bf16.mxu0 0
        %2115 = vmatpush1.bf16.msra.mxu0 0
        %2116 = vmatprep.subr.bf16.mxu0 0
        %2117 = vmatpush1.bf16.msra.mxu0 0
        %2118 = vmatprep.subr.bf16.mxu0 0
        %2119 = vmatpush1.bf16.msra.mxu0 0
        %2120 = vmatprep.subr.bf16.mxu0 0
        %2121 = vmatpush1.bf16.msra.mxu0 0
        %2122 = vmatprep.subr.bf16.mxu0 0
        %2123 = vmatpush1.bf16.msra.mxu0 0
        %2124 = vmatprep.subr.bf16.mxu0 0
        %2125 = vmatpush1.bf16.msra.mxu0 0
        %2126 = vmatprep.subr.bf16.mxu0 0
        %2127 = vmatpush1.bf16.msra.mxu0 0
        %2128 = vmatprep.subr.bf16.mxu0 0
        %2129 = vmatpush1.bf16.msra.mxu0 0
        %2130 = vmatprep.subr.bf16.mxu0 0
        %2131 = vmatpush1.bf16.msra.mxu0 0
        %2132 = vmatprep.subr.bf16.mxu0 0
        %2133 = vmatpush1.bf16.msra.mxu0 0
        %2134 = vmatprep.mubr.bf16.mxu0 0
        %2135 = vmatmul.mubr.bf16.gmra.mrb[0].mxu0 %v2014
        %v2136 = vpop.f32.mrb[0].mxu0
        %v2137 = vadd.f32 %v2001, %v2136
        %v2138 = vpop.f32.mrb[0].mxu0
        %v2139 = vadd.f32 %v2001, %v2138
        %v2140 = vpop.f32.mrb[0].mxu0
        %v2141 = vadd.f32 %v2006, %v2140
        %v2142 = vpop.f32.mrb[0].mxu0
        %v2143 = vadd.f32 %v2006, %v2142
        %2144 = vdwg.mxu0
        %2145 = vmatprep.subr.bf16.mxu0 %v1985
        %2146 = vmatpush1.bf16.msra.mxu0 %v1984
        %2147 = vmatprep.subr.bf16.mxu0 %v1993
        %2148 = vmatpush1.bf16.msra.mxu0 %v1992
        %2149 = vmatprep.subr.bf16.mxu0 0
        %2150 = vmatpush1.bf16.msra.mxu0 0
        %2151 = vmatprep.subr.bf16.mxu0 0
        %2152 = vmatpush1.bf16.msra.mxu0 0
        %2153 = vmatprep.subr.bf16.mxu0 0
        %2154 = vmatpush1.bf16.msra.mxu0 0
        %2155 = vmatprep.subr.bf16.mxu0 0
        %2156 = vmatpush1.bf16.msra.mxu0 0
        %2157 = vmatprep.subr.bf16.mxu0 0
        %2158 = vmatpush1.bf16.msra.mxu0 0
        %2159 = vmatprep.subr.bf16.mxu0 0
        %2160 = vmatpush1.bf16.msra.mxu0 0
        %2161 = vmatprep.subr.bf16.mxu0 0
        %2162 = vmatpush1.bf16.msra.mxu0 0
        %2163 = vmatprep.subr.bf16.mxu0 0
        %2164 = vmatpush1.bf16.msra.mxu0 0
        %2165 = vmatprep.subr.bf16.mxu0 0
        %2166 = vmatpush1.bf16.msra.mxu0 0
        %2167 = vmatprep.subr.bf16.mxu0 0
        %2168 = vmatpush1.bf16.msra.mxu0 0
        %2169 = vmatprep.subr.bf16.mxu0 0
        %2170 = vmatpush1.bf16.msra.mxu0 0
        %2171 = vmatprep.subr.bf16.mxu0 0
        %2172 = vmatpush1.bf16.msra.mxu0 0
        %2173 = vmatprep.subr.bf16.mxu0 0
        %2174 = vmatpush1.bf16.msra.mxu0 0
        %2175 = vmatprep.subr.bf16.mxu0 0
        %2176 = vmatpush1.bf16.msra.mxu0 0
        %2177 = vmatprep.mubr.bf16.mxu0 0
        %2178 = vmatmul.mubr.bf16.gmra.mrb[0].mxu0 %v2014
        %v2179 = vpop.f32.mrb[0].mxu0
        %v2180 = vadd.f32 %v2001, %v2179
        %v2181 = vpop.f32.mrb[0].mxu0
        %v2182 = vadd.f32 %v2001, %v2181
        %v2183 = vpop.f32.mrb[0].mxu0
        %v2184 = vadd.f32 %v2006, %v2183
        %v2185 = vpop.f32.mrb[0].mxu0
        %v2186 = vadd.f32 %v2006, %v2185
        %2187 = vdwg.mxu0
        %v2188 = vmax.f32 %v2051, 0.0
        %v2189 = vmax.f32 %v2053, 0.0
        %v2190 = vmax.f32 %v2094, 0.0
        %v2191 = vmax.f32 %v2096, 0.0
        %v2192 = vmax.f32 %v2137, 0.0
        %v2193 = vmax.f32 %v2139, 0.0
        %v2194 = vmax.f32 %v2180, 0.0
        %v2195 = vmax.f32 %v2182, 0.0
        %v2196 = vmax.f32 %v2055, 0.0
        %v2197 = vmax.f32 %v2057, 0.0
        %v2198 = vmax.f32 %v2098, 0.0
        %v2199 = vmax.f32 %v2100, 0.0
        %v2200 = vmax.f32 %v2141, 0.0
        %v2201 = vmax.f32 %v2143, 0.0
        %v2202 = vmax.f32 %v2184, 0.0
        %v2203 = vmax.f32 %v2186, 0.0
        %v2204 = vpack.c.bf16 %v2196, %v2188
        %v2205 = vpack.c.bf16 %v2197, %v2189
        %v2206 = vpack.c.bf16 %v2198, %v2190
        %v2207 = vpack.c.bf16 %v2199, %v2191
        %v2208 = vpack.c.bf16 %v2200, %v2192
        %v2209 = vpack.c.bf16 %v2201, %v2193
        %v2210 = vpack.c.bf16 %v2202, %v2194
        %v2211 = vpack.c.bf16 %v2203, %v2195
        %v2212 = vld [vmem:[%s10] sm:$0x3]
        %v2213 = vld [vmem:[%s11] sm:$0xf]
        %2215 = vset.pattern.permute.xlu0 0
        %2216 = vperm.xlu0 %2215, %v2213
        %v2217 = vpop.permute.xlu0 %2216
        %v2220 = vsel %vm1137, %v2212, 0
        %2222 = vmatprep.subr.bf16.mxu0 %v2205
        %2223 = vmatpush1.bf16.msra.mxu0 %v2204
        %2224 = vmatprep.subr.bf16.mxu0 0
        %2225 = vmatpush1.bf16.msra.mxu0 0
        %2226 = vmatprep.subr.bf16.mxu0 0
        %2227 = vmatpush1.bf16.msra.mxu0 0
        %2228 = vmatprep.subr.bf16.mxu0 0
        %2229 = vmatpush1.bf16.msra.mxu0 0
        %2230 = vmatprep.subr.bf16.mxu0 0
        %2231 = vmatpush1.bf16.msra.mxu0 0
        %2232 = vmatprep.subr.bf16.mxu0 0
        %2233 = vmatpush1.bf16.msra.mxu0 0
        %2234 = vmatprep.subr.bf16.mxu0 0
        %2235 = vmatpush1.bf16.msra.mxu0 0
        %2236 = vmatprep.subr.bf16.mxu0 0
        %2237 = vmatpush1.bf16.msra.mxu0 0
        %2238 = vmatprep.subr.bf16.mxu0 0
        %2239 = vmatpush1.bf16.msra.mxu0 0
        %2240 = vmatprep.subr.bf16.mxu0 0
        %2241 = vmatpush1.bf16.msra.mxu0 0
        %2242 = vmatprep.subr.bf16.mxu0 0
        %2243 = vmatpush1.bf16.msra.mxu0 0
        %2244 = vmatprep.subr.bf16.mxu0 0
        %2245 = vmatpush1.bf16.msra.mxu0 0
        %2246 = vmatprep.subr.bf16.mxu0 0
        %2247 = vmatpush1.bf16.msra.mxu0 0
        %2248 = vmatprep.subr.bf16.mxu0 0
        %2249 = vmatpush1.bf16.msra.mxu0 0
        %2250 = vmatprep.subr.bf16.mxu0 0
        %2251 = vmatpush1.bf16.msra.mxu0 0
        %2252 = vmatprep.subr.bf16.mxu0 0
        %2253 = vmatpush1.bf16.msra.mxu0 0
        %2254 = vmatprep.mubr.bf16.mxu0 0
        %2255 = vmatmul.mubr.bf16.gmra.mrb[0].mxu0 %v2220
        %v2256 = vpop.f32.mrb[0].mxu0
        %v2257 = vadd.f32 %v2217, %v2256
        %v2258 = vpop.f32.mrb[0].mxu0
        %v2259 = vadd.f32 %v2217, %v2258
        %v2260 = vpop.f32.mrb[0].mxu0
        %v2261 = vpop.f32.mrb[0].mxu0
        %2262 = vdwg.mxu0
        %2263 = vmatprep.subr.bf16.mxu0 %v2207
        %2264 = vmatpush1.bf16.msra.mxu0 %v2206
        %2265 = vmatprep.subr.bf16.mxu0 0
        %2266 = vmatpush1.bf16.msra.mxu0 0
        %2267 = vmatprep.subr.bf16.mxu0 0
        %2268 = vmatpush1.bf16.msra.mxu0 0
        %2269 = vmatprep.subr.bf16.mxu0 0
        %2270 = vmatpush1.bf16.msra.mxu0 0
        %2271 = vmatprep.subr.bf16.mxu0 0
        %2272 = vmatpush1.bf16.msra.mxu0 0
        %2273 = vmatprep.subr.bf16.mxu0 0
        %2274 = vmatpush1.bf16.msra.mxu0 0
        %2275 = vmatprep.subr.bf16.mxu0 0
        %2276 = vmatpush1.bf16.msra.mxu0 0
        %2277 = vmatprep.subr.bf16.mxu0 0
        %2278 = vmatpush1.bf16.msra.mxu0 0
        %2279 = vmatprep.subr.bf16.mxu0 0
        %2280 = vmatpush1.bf16.msra.mxu0 0
        %2281 = vmatprep.subr.bf16.mxu0 0
        %2282 = vmatpush1.bf16.msra.mxu0 0
        %2283 = vmatprep.subr.bf16.mxu0 0
        %2284 = vmatpush1.bf16.msra.mxu0 0
        %2285 = vmatprep.subr.bf16.mxu0 0
        %2286 = vmatpush1.bf16.msra.mxu0 0
        %2287 = vmatprep.subr.bf16.mxu0 0
        %2288 = vmatpush1.bf16.msra.mxu0 0
        %2289 = vmatprep.subr.bf16.mxu0 0
        %2290 = vmatpush1.bf16.msra.mxu0 0
        %2291 = vmatprep.subr.bf16.mxu0 0
        %2292 = vmatpush1.bf16.msra.mxu0 0
        %2293 = vmatprep.subr.bf16.mxu0 0
        %2294 = vmatpush1.bf16.msra.mxu0 0
        %2295 = vmatprep.mubr.bf16.mxu0 0
        %2296 = vmatmul.mubr.bf16.gmra.mrb[0].mxu0 %v2220
        %v2297 = vpop.f32.mrb[0].mxu0
        %v2298 = vadd.f32 %v2217, %v2297
        %v2299 = vpop.f32.mrb[0].mxu0
        %v2300 = vadd.f32 %v2217, %v2299
        %v2301 = vpop.f32.mrb[0].mxu0
        %v2302 = vpop.f32.mrb[0].mxu0
        %2303 = vdwg.mxu0
        %2304 = vmatprep.subr.bf16.mxu0 %v2209
        %2305 = vmatpush1.bf16.msra.mxu0 %v2208
        %2306 = vmatprep.subr.bf16.mxu0 0
        %2307 = vmatpush1.bf16.msra.mxu0 0
        %2308 = vmatprep.subr.bf16.mxu0 0
        %2309 = vmatpush1.bf16.msra.mxu0 0
        %2310 = vmatprep.subr.bf16.mxu0 0
        %2311 = vmatpush1.bf16.msra.mxu0 0
        %2312 = vmatprep.subr.bf16.mxu0 0
        %2313 = vmatpush1.bf16.msra.mxu0 0
        %2314 = vmatprep.subr.bf16.mxu0 0
        %2315 = vmatpush1.bf16.msra.mxu0 0
        %2316 = vmatprep.subr.bf16.mxu0 0
        %2317 = vmatpush1.bf16.msra.mxu0 0
        %2318 = vmatprep.subr.bf16.mxu0 0
        %2319 = vmatpush1.bf16.msra.mxu0 0
        %2320 = vmatprep.subr.bf16.mxu0 0
        %2321 = vmatpush1.bf16.msra.mxu0 0
        %2322 = vmatprep.subr.bf16.mxu0 0
        %2323 = vmatpush1.bf16.msra.mxu0 0
        %2324 = vmatprep.subr.bf16.mxu0 0
        %2325 = vmatpush1.bf16.msra.mxu0 0
        %2326 = vmatprep.subr.bf16.mxu0 0
        %2327 = vmatpush1.bf16.msra.mxu0 0
        %2328 = vmatprep.subr.bf16.mxu0 0
        %2329 = vmatpush1.bf16.msra.mxu0 0
        %2330 = vmatprep.subr.bf16.mxu0 0
        %2331 = vmatpush1.bf16.msra.mxu0 0
        %2332 = vmatprep.subr.bf16.mxu0 0
        %2333 = vmatpush1.bf16.msra.mxu0 0
        %2334 = vmatprep.subr.bf16.mxu0 0
        %2335 = vmatpush1.bf16.msra.mxu0 0
        %2336 = vmatprep.mubr.bf16.mxu0 0
        %2337 = vmatmul.mubr.bf16.gmra.mrb[0].mxu0 %v2220
        %v2338 = vpop.f32.mrb[0].mxu0
        %v2339 = vadd.f32 %v2217, %v2338
        %v2340 = vpop.f32.mrb[0].mxu0
        %v2341 = vadd.f32 %v2217, %v2340
        %v2342 = vpop.f32.mrb[0].mxu0
        %v2343 = vpop.f32.mrb[0].mxu0
        %2344 = vdwg.mxu0
        %2345 = vmatprep.subr.bf16.mxu0 %v2211
        %2346 = vmatpush1.bf16.msra.mxu0 %v2210
        %2347 = vmatprep.subr.bf16.mxu0 0
        %2348 = vmatpush1.bf16.msra.mxu0 0
        %2349 = vmatprep.subr.bf16.mxu0 0
        %2350 = vmatpush1.bf16.msra.mxu0 0
        %2351 = vmatprep.subr.bf16.mxu0 0
        %2352 = vmatpush1.bf16.msra.mxu0 0
        %2353 = vmatprep.subr.bf16.mxu0 0
        %2354 = vmatpush1.bf16.msra.mxu0 0
        %2355 = vmatprep.subr.bf16.mxu0 0
        %2356 = vmatpush1.bf16.msra.mxu0 0
        %2357 = vmatprep.subr.bf16.mxu0 0
        %2358 = vmatpush1.bf16.msra.mxu0 0
        %2359 = vmatprep.subr.bf16.mxu0 0
        %2360 = vmatpush1.bf16.msra.mxu0 0
        %2361 = vmatprep.subr.bf16.mxu0 0
        %2362 = vmatpush1.bf16.msra.mxu0 0
        %2363 = vmatprep.subr.bf16.mxu0 0
        %2364 = vmatpush1.bf16.msra.mxu0 0
        %2365 = vmatprep.subr.bf16.mxu0 0
        %2366 = vmatpush1.bf16.msra.mxu0 0
        %2367 = vmatprep.subr.bf16.mxu0 0
        %2368 = vmatpush1.bf16.msra.mxu0 0
        %2369 = vmatprep.subr.bf16.mxu0 0
        %2370 = vmatpush1.bf16.msra.mxu0 0
        %2371 = vmatprep.subr.bf16.mxu0 0
        %2372 = vmatpush1.bf16.msra.mxu0 0
        %2373 = vmatprep.subr.bf16.mxu0 0
        %2374 = vmatpush1.bf16.msra.mxu0 0
        %2375 = vmatprep.subr.bf16.mxu0 0
        %2376 = vmatpush1.bf16.msra.mxu0 0
        %2377 = vmatprep.mubr.bf16.mxu0 0
        %2378 = vmatmul.mubr.bf16.gmra.mrb[0].mxu0 %v2220
        %v2379 = vpop.f32.mrb[0].mxu0
        %v2380 = vadd.f32 %v2217, %v2379
        %v2381 = vpop.f32.mrb[0].mxu0
        %v2382 = vadd.f32 %v2217, %v2381
        %v2383 = vpop.f32.mrb[0].mxu0
        %v2384 = vpop.f32.mrb[0].mxu0
        %2385 = vdwg.mxu0
        %v2394 = vcombine.low %v2257, %v2259
        %v2395 = vcombine.low %v2298, %v2300
        %v2396 = vcombine.low %v2339, %v2341
        %v2397 = vcombine.low %v2380, %v2382
        %2402 = vst [vmem:[%s455] sm:$0xff] %v2394
        %2403 = vst [vmem:[%s455 + $0x8] sm:$0xff] %v2395
        %2404 = vst [vmem:[%s455 + $0x10] sm:$0xff] %v2396
        %2405 = vst [vmem:[%s455 + $0x18] sm:$0xff] %v2397
        %s2406 = sand.u32 %s314, 1
        %s2407 = scalar_lea.sflag [#allocation3], %s2406
        %s2408 = sand.u32 %s314, 1
        %s2409 = smul.addr %s2408, 32
        %s2410 = scalar_lea.vmem [#allocation2], %s2409
        // Predicated region
        $region69: #{tpu_custom_call.1} parent=67 // pred_check
          %p2411 = pneg %p324
        $region70: #{tpu_custom_call.1} parent=67 // pred_check_branch
          %2413 = sbr.rel (%p2411) target = $region72
        $region71: #{tpu_custom_call.1} parent=67 // pred_region
          %s2414 = smul.u32 8, %s31
          %s2416 = ssub.s32 512, 512
          %2417 = vsyncadd %s2407, %s2416
          %s2418 = smul.addr %s30, 8
          %s2419 = sadd.s32 %s2414, %s2418
          %s2420 = smul.addr %s2419, 64
          %s2421 = scalar_lea.hbm %s12, %s2420
          %s2423 = sshll.u32 %s2410, 4
          %s2424 = int_to_ptr.vmem [resolvable:$true] %s2423
          %2426 = dma.vmem_to_hbm [thread:$0]  %s2424, 512, %s2421, %s2407
        $region72: #{tpu_custom_call.1} parent=67 // pred_fallthru
          _
      $region68: #{tpu_custom_call.1} parent=5 // pred_fallthru
        _
      %p2427 = scmp.le.s32.totalorder 2, %s21
      // Predicated region
      $region73: #{tpu_custom_call.1} parent=5 // pred_check
        %p2428 = pneg %p2427
      $region74: #{tpu_custom_call.1} parent=5 // pred_check_branch
        %2430 = sbr.rel (%p2428) target = $region76
      $region75: #{tpu_custom_call.1} parent=5 // pred_region
        %s2431 = ssub.s32 %s21, 2
        // Predicated region
        $region77: #{tpu_custom_call.1} parent=75 // pred_check
          %p2432 = pneg %p330
        $region78: #{tpu_custom_call.1} parent=75 // pred_check_branch
          %2434 = sbr.rel (%p2432) target = $region80
        $region79: #{tpu_custom_call.1} parent=75 // pred_region
          %s2435 = sand.u32 %s315, 1
          %s2436 = scalar_lea.sflag [#allocation3], %s2435
          %s2437 = sand.u32 %s315, 1
          %s2438 = smul.addr %s2437, 32
          %s2439 = scalar_lea.vmem [#allocation2], %s2438
          %2440 = dma.done %s2436, 512
        $region80: #{tpu_custom_call.1} parent=75 // pred_fallthru
          _
      $region76: #{tpu_custom_call.1} parent=5 // pred_fallthru
        _
    $region6: #{tpu_custom_call.1} parent=1 // loop_footer
      %s25 = sadd.s32 1, %s21
    $region7: #{tpu_custom_call.1} parent=1 // loop_footer_branch
      %20 = sbr.rel target = $region3
    $region8: #{tpu_custom_call.1} parent=1 // loop_exit
      _
    %2441 = vsyncpa [#allocation3], 1
    %s2442 = scalar_lea.sflag [#allocation3], 1
    %2443 = vsyncpa %s2442, 1

</llo_original>
